<compile_context>
chip_gen: v7x
topology: tpu7x:2x2x1
jax: 0.10.0
libtpu: 0.0.40
codegen_flags: <defaults>
</compile_context>

<pallas_src>
import functools

import jax
import jax.numpy as jnp
from jax.experimental import pallas as pl
from jax.experimental.pallas import tpu as pltpu

LN_EPS = 1e-5        # PyTorch nn.LayerNorm default
OUT_PAD = 128        # lane-dense padded output width
TB_MAX = 2048        # batch-tile cap (v6e: amortize per-step overhead)
VMEM_LIMIT = 48 * 1024 * 1024   # fits v7x 64 MiB physical; needed on v5e


def _round_up(n, m):
    return (n + m - 1) // m * m


def _cdiv(a, b):
    return (a + b - 1) // b


def _ln_relu_bf16(h, gamma, beta):
    """Streamlined LayerNorm + ReLU + bf16 cast.

    Single-pass stats (mean and E[h^2] computed independently, var = E[h^2] -
    mean^2), per-row scale/shift fold, then one mul+add per element for the
    row-stats part before the column-wise gamma/beta affine.  rsqrt lowers to
    the EUP (free slot alongside MXU/VALU).  All in f32 (portable to v5e).
    Padded all-zero batch rows give var=0 -> rsqrt(eps) is finite (no NaN/inf);
    keep LN_EPS > 0.
    """
    mean = jnp.mean(h, axis=-1, keepdims=True)
    msq = jnp.mean(h * h, axis=-1, keepdims=True)
    var = msq - mean * mean
    inv = jax.lax.rsqrt(var + LN_EPS)          # (TB, 1)
    shift = -mean * inv                        # (TB, 1) per-row scalar
    y = (h * inv + shift) * gamma + beta
    return jnp.maximum(y, 0.0).astype(jnp.bfloat16)


def dqn_kernel(
    x_ref,
    w1_ref, b1_ref, g1_ref, be1_ref,
    w2_ref, b2_ref, g2_ref, be2_ref,
    w3_ref, b3_ref, g3_ref, be3_ref,
    w4_ref, b4_ref,
    out_ref,
):
    # fc1 -> ln1 -> relu.  Weights are bf16; MXU accumulates f32.
    # x is lane-sparse at S=8 (fc1 is <1% of FLOPs) -- acceptable; pad K to
    # 128 if state_size grows.
    x = x_ref[...].astype(jnp.bfloat16)
    h = jnp.dot(x, w1_ref[...], preferred_element_type=jnp.float32) + b1_ref[...]
    h = _ln_relu_bf16(h, g1_ref[...], be1_ref[...])

    # fc2 -> ln2 -> relu
    h = jnp.dot(h, w2_ref[...], preferred_element_type=jnp.float32) + b2_ref[...]
    h = _ln_relu_bf16(h, g2_ref[...], be2_ref[...])

    # fc3 -> ln3 -> relu
    h = jnp.dot(h, w3_ref[...], preferred_element_type=jnp.float32) + b3_ref[...]
    h = _ln_relu_bf16(h, g3_ref[...], be3_ref[...])

    # fc4: lane-dense (TB, 128) f32 store; wrapper slices [:, :action_size].
    out_ref[...] = (
        jnp.dot(h, w4_ref[...], preferred_element_type=jnp.float32) + b4_ref[...]
    )


def prepare_params(params, action_size):
    """One-time prep: cast weights to bf16 (HBM holds bf16 -> half the DMA
    bytes) and zero-pad fc4 weight AND bias to a lane-dense 128-wide output
    (padded lanes stay exactly zero)."""
    out_pad = max(OUT_PAD, _round_up(action_size, 128))
    w4 = jnp.pad(params["w4"], ((0, 0), (0, out_pad - action_size)))
    b4 = jnp.pad(params["b4"], ((0, 0), (0, out_pad - action_size)))
    return {
        "w1": params["w1"].astype(jnp.bfloat16),
        "w2": params["w2"].astype(jnp.bfloat16),
        "w3": params["w3"].astype(jnp.bfloat16),
        "w4": w4.astype(jnp.bfloat16),
        "b1": params["b1"], "b2": params["b2"], "b3": params["b3"], "b4": b4,
        "g1": params["g1"], "g2": params["g2"], "g3": params["g3"],
        "be1": params["be1"], "be2": params["be2"], "be3": params["be3"],
    }


@functools.partial(jax.jit, static_argnames=("action_size",))
def dqn_forward(x, prepped, action_size):
    """x: (B, state_size) f32.  prepped: output of prepare_params."""
    B, S = x.shape
    out_pad = prepped["w4"].shape[1]

    # Grid/tile shaping:
    #   * at least 2 tiles (and an even count) so v7x's 2 TensorCores both get
    #     work under dimension_semantics=("parallel",);
    #   * balanced tiles: TB = round_up(cdiv(B, num_tiles), 8) so the last
    #     tile isn't mostly padding;
    #   * TB capped at TB_MAX (VMEM-safe on all generations).
    num_tiles = max(2, _cdiv(B, TB_MAX))
    if num_tiles % 2 != 0:
        num_tiles += 1
    TB = _round_up(_cdiv(B, num_tiles), 8)
    B_pad = num_tiles * TB
    if B_pad != B:
        x = jnp.pad(x, ((0, B_pad - B), (0, 0)))

    weight_args = (
        prepped["w1"], prepped["b1"], prepped["g1"], prepped["be1"],
        prepped["w2"], prepped["b2"], prepped["g2"], prepped["be2"],
        prepped["w3"], prepped["b3"], prepped["g3"], prepped["be3"],
        prepped["w4"], prepped["b4"],
    )

    # x / out are tiled over the batch grid; all weights use full-array blocks
    # with a constant index_map so they stay resident in VMEM across the grid.
    in_specs = [pl.BlockSpec((TB, S), lambda i: (i, 0))]
    in_specs += [pl.BlockSpec(w.shape, lambda i: (0, 0)) for w in weight_args]
    out_spec = pl.BlockSpec((TB, out_pad), lambda i: (i, 0))

    q_padded = pl.pallas_call(
        dqn_kernel,
        out_shape=jax.ShapeDtypeStruct((B_pad, out_pad), jnp.float32),
        grid=(num_tiles,),
        in_specs=in_specs,
        out_specs=out_spec,
        compiler_params=pltpu.CompilerParams(
            dimension_semantics=("parallel",),
            vmem_limit_bytes=VMEM_LIMIT),
    )(x, *weight_args)

    return q_padded[:B, :action_size]


def init_params(key, state_size, action_size):
    """Deterministic synthetic parameter init (shapes match the PyTorch module)."""
    dims = [(state_size, 256), (256, 512), (512, 256), (256, action_size)]
    params = {}
    keys = jax.random.split(key, 2 * len(dims))
    for i, (fan_in, fan_out) in enumerate(dims):
        bound = 1.0 / jnp.sqrt(fan_in)
        # Stored as (in, out) == transpose of PyTorch's (out, in) weight.
        params[f"w{i+1}"] = jax.random.uniform(
            keys[2 * i], (fan_in, fan_out), jnp.float32, -bound, bound)
        params[f"b{i+1}"] = jax.random.uniform(
            keys[2 * i + 1], (1, fan_out), jnp.float32, -bound, bound)
    # LayerNorm affine params (PyTorch default: gamma=1, beta=0).
    for i, d in enumerate([256, 512, 256]):
        params[f"g{i+1}"] = jnp.ones((1, d), jnp.float32)
        params[f"be{i+1}"] = jnp.zeros((1, d), jnp.float32)
    return params


def _reference_forward(x, prepped, action_size):
    """Pure-JAX reference using the exact same bf16-MXU / f32-epilogue math."""
    def layer(h_bf16, w, b):
        return jnp.dot(h_bf16, w, preferred_element_type=jnp.float32) + b

    h = layer(x.astype(jnp.bfloat16), prepped["w1"], prepped["b1"])
    h = _ln_relu_bf16(h, prepped["g1"], prepped["be1"])
    h = layer(h, prepped["w2"], prepped["b2"])
    h = _ln_relu_bf16(h, prepped["g2"], prepped["be2"])
    h = layer(h, prepped["w3"], prepped["b3"])
    h = _ln_relu_bf16(h, prepped["g3"], prepped["be3"])
    q = layer(h, prepped["w4"], prepped["b4"])
    return q[:, :action_size]


if __name__ == "__main__":
    state_size = 8
    action_size = 4
    batch = 8

    key = jax.random.PRNGKey(0)
    k_x, k_p = jax.random.split(key)
    x = jax.random.normal(k_x, (batch, state_size), jnp.float32)
    params = init_params(k_p, state_size, action_size)
    prepped = prepare_params(params, action_size)

    q = dqn_forward(x, prepped, action_size)
    jax.block_until_ready(q)

    assert q.shape == (batch, action_size)
    assert q.dtype == jnp.float32

    q_ref = _reference_forward(x, prepped, action_size)
    assert jnp.allclose(q, q_ref, rtol=2e-2, atol=2e-2), "mismatch vs reference"

    # Quick second shape to exercise an uneven batch (balanced-tile path).
    x2 = jax.random.normal(jax.random.PRNGKey(1), (37, state_size), jnp.float32)
    q2 = dqn_forward(x2, prepped, action_size)
    jax.block_until_ready(q2)
    assert q2.shape == (37, action_size)
    q2_ref = _reference_forward(x2, prepped, action_size)
    assert jnp.allclose(q2, q2_ref, rtol=2e-2, atol=2e-2), "mismatch vs reference (B=37)"

    print("KERNEL_OK")
</pallas_src>

<mosaic_0001>
module attributes {stable_mosaic.version = 11 : i64} {
  func.func @dqn_kernel(%arg0: i32, %arg1: memref<8x8xf32, #tpu.memory_space<vmem>>, %arg2: memref<8x256xbf16, #tpu.memory_space<vmem>>, %arg3: memref<1x256xf32, #tpu.memory_space<vmem>>, %arg4: memref<1x256xf32, #tpu.memory_space<vmem>>, %arg5: memref<1x256xf32, #tpu.memory_space<vmem>>, %arg6: memref<256x512xbf16, #tpu.memory_space<vmem>>, %arg7: memref<1x512xf32, #tpu.memory_space<vmem>>, %arg8: memref<1x512xf32, #tpu.memory_space<vmem>>, %arg9: memref<1x512xf32, #tpu.memory_space<vmem>>, %arg10: memref<512x256xbf16, #tpu.memory_space<vmem>>, %arg11: memref<1x256xf32, #tpu.memory_space<vmem>>, %arg12: memref<1x256xf32, #tpu.memory_space<vmem>>, %arg13: memref<1x256xf32, #tpu.memory_space<vmem>>, %arg14: memref<256x128xbf16, #tpu.memory_space<vmem>>, %arg15: memref<1x128xf32, #tpu.memory_space<vmem>>, %arg16: memref<8x128xf32, #tpu.memory_space<vmem>>) attributes {dimension_semantics = [#tpu.dimension_semantics<parallel>], iteration_bounds = array<i64: 2>, scalar_prefetch = 0 : i64, scratch_operands = 0 : i64, tpu.core_type = #tpu.core_type<tc>, window_params = [{transform_indices = @transform_0, window_bounds = array<i64: 8, 8>}, {pipeline_mode = #tpu.pipeline_mode<synchronous>, transform_indices = @transform_1, window_bounds = array<i64: 8, 256>}, {pipeline_mode = #tpu.pipeline_mode<synchronous>, transform_indices = @transform_2, window_bounds = array<i64: 1, 256>}, {pipeline_mode = #tpu.pipeline_mode<synchronous>, transform_indices = @transform_3, window_bounds = array<i64: 1, 256>}, {pipeline_mode = #tpu.pipeline_mode<synchronous>, transform_indices = @transform_4, window_bounds = array<i64: 1, 256>}, {pipeline_mode = #tpu.pipeline_mode<synchronous>, transform_indices = @transform_5, window_bounds = array<i64: 256, 512>}, {pipeline_mode = #tpu.pipeline_mode<synchronous>, transform_indices = @transform_6, window_bounds = array<i64: 1, 512>}, {pipeline_mode = #tpu.pipeline_mode<synchronous>, transform_indices = @transform_7, window_bounds = array<i64: 1, 512>}, {pipeline_mode = #tpu.pipeline_mode<synchronous>, transform_indices = @transform_8, window_bounds = array<i64: 1, 512>}, {pipeline_mode = #tpu.pipeline_mode<synchronous>, transform_indices = @transform_9, window_bounds = array<i64: 512, 256>}, {pipeline_mode = #tpu.pipeline_mode<synchronous>, transform_indices = @transform_10, window_bounds = array<i64: 1, 256>}, {pipeline_mode = #tpu.pipeline_mode<synchronous>, transform_indices = @transform_11, window_bounds = array<i64: 1, 256>}, {pipeline_mode = #tpu.pipeline_mode<synchronous>, transform_indices = @transform_12, window_bounds = array<i64: 1, 256>}, {pipeline_mode = #tpu.pipeline_mode<synchronous>, transform_indices = @transform_13, window_bounds = array<i64: 256, 128>}, {pipeline_mode = #tpu.pipeline_mode<synchronous>, transform_indices = @transform_14, window_bounds = array<i64: 1, 128>}, {transform_indices = @transform_15, window_bounds = array<i64: 8, 128>}]} {
    %c0 = arith.constant 0 : index
    %c0_0 = arith.constant 0 : index
    %0 = vector.load %arg1[%c0, %c0_0] : memref<8x8xf32, #tpu.memory_space<vmem>>, vector<8x8xf32>
    %1 = arith.truncf %0 : vector<8x8xf32> to vector<8x8xbf16>
    %c0_1 = arith.constant 0 : index
    %c0_2 = arith.constant 0 : index
    %2 = vector.load %arg2[%c0_1, %c0_2] : memref<8x256xbf16, #tpu.memory_space<vmem>>, vector<8x256xbf16>
    %cst = arith.constant dense<0.000000e+00> : vector<8x256xf32>
    %3 = tpu.matmul %1, %2, %cst {dimension_numbers = #tpu.dot_dimension_numbers<[1], [0], [0], [1], [0, 0, 1, 1], [], []>} : vector<8x8xbf16>, vector<8x256xbf16>, vector<8x256xf32> -> vector<8x256xf32>
    %c0_3 = arith.constant 0 : index
    %c0_4 = arith.constant 0 : index
    %4 = vector.load %arg3[%c0_3, %c0_4] : memref<1x256xf32, #tpu.memory_space<vmem>>, vector<1x256xf32>
    %5 = vector.broadcast %4 : vector<1x256xf32> to vector<8x256xf32>
    %6 = arith.addf %3, %5 : vector<8x256xf32>
    %c0_5 = arith.constant 0 : index
    %c0_6 = arith.constant 0 : index
    %7 = vector.load %arg4[%c0_5, %c0_6] : memref<1x256xf32, #tpu.memory_space<vmem>>, vector<1x256xf32>
    %c0_7 = arith.constant 0 : index
    %c0_8 = arith.constant 0 : index
    %8 = vector.load %arg5[%c0_7, %c0_8] : memref<1x256xf32, #tpu.memory_space<vmem>>, vector<1x256xf32>
    %cst_9 = arith.constant dense<0.000000e+00> : vector<8xf32>
    %9 = vector.multi_reduction <add>, %6, %cst_9 [1] : vector<8x256xf32> to vector<8xf32>
    %10 = vector.shape_cast %9 : vector<8xf32> to vector<8x1xf32>
    %cst_10 = arith.constant 2.560000e+02 : f32
    %11 = vector.broadcast %cst_10 : f32 to vector<8x1xf32>
    %12 = arith.divf %10, %11 : vector<8x1xf32>
    %13 = arith.mulf %6, %6 : vector<8x256xf32>
    %cst_11 = arith.constant dense<0.000000e+00> : vector<8xf32>
    %14 = vector.multi_reduction <add>, %13, %cst_11 [1] : vector<8x256xf32> to vector<8xf32>
    %15 = vector.shape_cast %14 : vector<8xf32> to vector<8x1xf32>
    %cst_12 = arith.constant 2.560000e+02 : f32
    %16 = vector.broadcast %cst_12 : f32 to vector<8x1xf32>
    %17 = arith.divf %15, %16 : vector<8x1xf32>
    %18 = arith.mulf %12, %12 : vector<8x1xf32>
    %19 = arith.subf %17, %18 : vector<8x1xf32>
    %cst_13 = arith.constant 9.99999974E-6 : f32
    %20 = vector.broadcast %cst_13 : f32 to vector<8x1xf32>
    %21 = arith.addf %19, %20 : vector<8x1xf32>
    %22 = math.rsqrt %21 : vector<8x1xf32>
    %cst_14 = arith.constant 0.000000e+00 : f32
    %23 = vector.broadcast %cst_14 : f32 to vector<8x1xf32>
    %24 = arith.subf %23, %12 : vector<8x1xf32>
    %25 = arith.mulf %24, %22 : vector<8x1xf32>
    %26 = vector.broadcast %22 : vector<8x1xf32> to vector<8x256xf32>
    %27 = arith.mulf %6, %26 : vector<8x256xf32>
    %28 = vector.broadcast %25 : vector<8x1xf32> to vector<8x256xf32>
    %29 = arith.addf %27, %28 : vector<8x256xf32>
    %30 = vector.broadcast %7 : vector<1x256xf32> to vector<8x256xf32>
    %31 = arith.mulf %29, %30 : vector<8x256xf32>
    %32 = vector.broadcast %8 : vector<1x256xf32> to vector<8x256xf32>
    %33 = arith.addf %31, %32 : vector<8x256xf32>
    %cst_15 = arith.constant 0.000000e+00 : f32
    %34 = vector.broadcast %cst_15 : f32 to vector<8x256xf32>
    %35 = arith.maximumf %33, %34 : vector<8x256xf32>
    %36 = arith.truncf %35 : vector<8x256xf32> to vector<8x256xbf16>
    %c0_16 = arith.constant 0 : index
    %c0_17 = arith.constant 0 : index
    %37 = vector.load %arg6[%c0_16, %c0_17] : memref<256x512xbf16, #tpu.memory_space<vmem>>, vector<256x512xbf16>
    %cst_18 = arith.constant dense<0.000000e+00> : vector<8x512xf32>
    %38 = tpu.matmul %36, %37, %cst_18 {dimension_numbers = #tpu.dot_dimension_numbers<[1], [0], [0], [1], [0, 0, 1, 1], [], []>} : vector<8x256xbf16>, vector<256x512xbf16>, vector<8x512xf32> -> vector<8x512xf32>
    %c0_19 = arith.constant 0 : index
    %c0_20 = arith.constant 0 : index
    %39 = vector.load %arg7[%c0_19, %c0_20] : memref<1x512xf32, #tpu.memory_space<vmem>>, vector<1x512xf32>
    %40 = vector.broadcast %39 : vector<1x512xf32> to vector<8x512xf32>
    %41 = arith.addf %38, %40 : vector<8x512xf32>
    %c0_21 = arith.constant 0 : index
    %c0_22 = arith.constant 0 : index
    %42 = vector.load %arg8[%c0_21, %c0_22] : memref<1x512xf32, #tpu.memory_space<vmem>>, vector<1x512xf32>
    %c0_23 = arith.constant 0 : index
    %c0_24 = arith.constant 0 : index
    %43 = vector.load %arg9[%c0_23, %c0_24] : memref<1x512xf32, #tpu.memory_space<vmem>>, vector<1x512xf32>
    %cst_25 = arith.constant dense<0.000000e+00> : vector<8xf32>
    %44 = vector.multi_reduction <add>, %41, %cst_25 [1] : vector<8x512xf32> to vector<8xf32>
    %45 = vector.shape_cast %44 : vector<8xf32> to vector<8x1xf32>
    %cst_26 = arith.constant 5.120000e+02 : f32
    %46 = vector.broadcast %cst_26 : f32 to vector<8x1xf32>
    %47 = arith.divf %45, %46 : vector<8x1xf32>
    %48 = arith.mulf %41, %41 : vector<8x512xf32>
    %cst_27 = arith.constant dense<0.000000e+00> : vector<8xf32>
    %49 = vector.multi_reduction <add>, %48, %cst_27 [1] : vector<8x512xf32> to vector<8xf32>
    %50 = vector.shape_cast %49 : vector<8xf32> to vector<8x1xf32>
    %cst_28 = arith.constant 5.120000e+02 : f32
    %51 = vector.broadcast %cst_28 : f32 to vector<8x1xf32>
    %52 = arith.divf %50, %51 : vector<8x1xf32>
    %53 = arith.mulf %47, %47 : vector<8x1xf32>
    %54 = arith.subf %52, %53 : vector<8x1xf32>
    %cst_29 = arith.constant 9.99999974E-6 : f32
    %55 = vector.broadcast %cst_29 : f32 to vector<8x1xf32>
    %56 = arith.addf %54, %55 : vector<8x1xf32>
    %57 = math.rsqrt %56 : vector<8x1xf32>
    %cst_30 = arith.constant 0.000000e+00 : f32
    %58 = vector.broadcast %cst_30 : f32 to vector<8x1xf32>
    %59 = arith.subf %58, %47 : vector<8x1xf32>
    %60 = arith.mulf %59, %57 : vector<8x1xf32>
    %61 = vector.broadcast %57 : vector<8x1xf32> to vector<8x512xf32>
    %62 = arith.mulf %41, %61 : vector<8x512xf32>
    %63 = vector.broadcast %60 : vector<8x1xf32> to vector<8x512xf32>
    %64 = arith.addf %62, %63 : vector<8x512xf32>
    %65 = vector.broadcast %42 : vector<1x512xf32> to vector<8x512xf32>
    %66 = arith.mulf %64, %65 : vector<8x512xf32>
    %67 = vector.broadcast %43 : vector<1x512xf32> to vector<8x512xf32>
    %68 = arith.addf %66, %67 : vector<8x512xf32>
    %cst_31 = arith.constant 0.000000e+00 : f32
    %69 = vector.broadcast %cst_31 : f32 to vector<8x512xf32>
    %70 = arith.maximumf %68, %69 : vector<8x512xf32>
    %71 = arith.truncf %70 : vector<8x512xf32> to vector<8x512xbf16>
    %c0_32 = arith.constant 0 : index
    %c0_33 = arith.constant 0 : index
    %72 = vector.load %arg10[%c0_32, %c0_33] : memref<512x256xbf16, #tpu.memory_space<vmem>>, vector<512x256xbf16>
    %cst_34 = arith.constant dense<0.000000e+00> : vector<8x256xf32>
    %73 = tpu.matmul %71, %72, %cst_34 {dimension_numbers = #tpu.dot_dimension_numbers<[1], [0], [0], [1], [0, 0, 1, 1], [], []>} : vector<8x512xbf16>, vector<512x256xbf16>, vector<8x256xf32> -> vector<8x256xf32>
    %c0_35 = arith.constant 0 : index
    %c0_36 = arith.constant 0 : index
    %74 = vector.load %arg11[%c0_35, %c0_36] : memref<1x256xf32, #tpu.memory_space<vmem>>, vector<1x256xf32>
    %75 = vector.broadcast %74 : vector<1x256xf32> to vector<8x256xf32>
    %76 = arith.addf %73, %75 : vector<8x256xf32>
    %c0_37 = arith.constant 0 : index
    %c0_38 = arith.constant 0 : index
    %77 = vector.load %arg12[%c0_37, %c0_38] : memref<1x256xf32, #tpu.memory_space<vmem>>, vector<1x256xf32>
    %c0_39 = arith.constant 0 : index
    %c0_40 = arith.constant 0 : index
    %78 = vector.load %arg13[%c0_39, %c0_40] : memref<1x256xf32, #tpu.memory_space<vmem>>, vector<1x256xf32>
    %cst_41 = arith.constant dense<0.000000e+00> : vector<8xf32>
    %79 = vector.multi_reduction <add>, %76, %cst_41 [1] : vector<8x256xf32> to vector<8xf32>
    %80 = vector.shape_cast %79 : vector<8xf32> to vector<8x1xf32>
    %cst_42 = arith.constant 2.560000e+02 : f32
    %81 = vector.broadcast %cst_42 : f32 to vector<8x1xf32>
    %82 = arith.divf %80, %81 : vector<8x1xf32>
    %83 = arith.mulf %76, %76 : vector<8x256xf32>
    %cst_43 = arith.constant dense<0.000000e+00> : vector<8xf32>
    %84 = vector.multi_reduction <add>, %83, %cst_43 [1] : vector<8x256xf32> to vector<8xf32>
    %85 = vector.shape_cast %84 : vector<8xf32> to vector<8x1xf32>
    %cst_44 = arith.constant 2.560000e+02 : f32
    %86 = vector.broadcast %cst_44 : f32 to vector<8x1xf32>
    %87 = arith.divf %85, %86 : vector<8x1xf32>
    %88 = arith.mulf %82, %82 : vector<8x1xf32>
    %89 = arith.subf %87, %88 : vector<8x1xf32>
    %cst_45 = arith.constant 9.99999974E-6 : f32
    %90 = vector.broadcast %cst_45 : f32 to vector<8x1xf32>
    %91 = arith.addf %89, %90 : vector<8x1xf32>
    %92 = math.rsqrt %91 : vector<8x1xf32>
    %cst_46 = arith.constant 0.000000e+00 : f32
    %93 = vector.broadcast %cst_46 : f32 to vector<8x1xf32>
    %94 = arith.subf %93, %82 : vector<8x1xf32>
    %95 = arith.mulf %94, %92 : vector<8x1xf32>
    %96 = vector.broadcast %92 : vector<8x1xf32> to vector<8x256xf32>
    %97 = arith.mulf %76, %96 : vector<8x256xf32>
    %98 = vector.broadcast %95 : vector<8x1xf32> to vector<8x256xf32>
    %99 = arith.addf %97, %98 : vector<8x256xf32>
    %100 = vector.broadcast %77 : vector<1x256xf32> to vector<8x256xf32>
    %101 = arith.mulf %99, %100 : vector<8x256xf32>
    %102 = vector.broadcast %78 : vector<1x256xf32> to vector<8x256xf32>
    %103 = arith.addf %101, %102 : vector<8x256xf32>
    %cst_47 = arith.constant 0.000000e+00 : f32
    %104 = vector.broadcast %cst_47 : f32 to vector<8x256xf32>
    %105 = arith.maximumf %103, %104 : vector<8x256xf32>
    %106 = arith.truncf %105 : vector<8x256xf32> to vector<8x256xbf16>
    %c0_48 = arith.constant 0 : index
    %c0_49 = arith.constant 0 : index
    %107 = vector.load %arg14[%c0_48, %c0_49] : memref<256x128xbf16, #tpu.memory_space<vmem>>, vector<256x128xbf16>
    %cst_50 = arith.constant dense<0.000000e+00> : vector<8x128xf32>
    %108 = tpu.matmul %106, %107, %cst_50 {dimension_numbers = #tpu.dot_dimension_numbers<[1], [0], [0], [1], [0, 0, 1, 1], [], []>} : vector<8x256xbf16>, vector<256x128xbf16>, vector<8x128xf32> -> vector<8x128xf32>
    %c0_51 = arith.constant 0 : index
    %c0_52 = arith.constant 0 : index
    %109 = vector.load %arg15[%c0_51, %c0_52] : memref<1x128xf32, #tpu.memory_space<vmem>>, vector<1x128xf32>
    %110 = vector.broadcast %109 : vector<1x128xf32> to vector<8x128xf32>
    %111 = arith.addf %108, %110 : vector<8x128xf32>
    %c0_53 = arith.constant 0 : index
    %c0_54 = arith.constant 0 : index
    %112 = vector.load %arg16[%c0_53, %c0_54] : memref<8x128xf32, #tpu.memory_space<vmem>>, vector<8x128xf32>
    tpu.vector_store %arg16[%c0_53, %c0_54], %111 {strides = array<i32>} : memref<8x128xf32, #tpu.memory_space<vmem>>, vector<8x128xf32>,
    return
  }
  func.func @transform_0(%arg0: i32) -> (i32, i32) {
    %c0_i32 = arith.constant 0 : i32
    %c0_i32_0 = arith.constant 0 : i32
    return %arg0, %c0_i32 : i32, i32
  }
  func.func @transform_1(%arg0: i32) -> (i32, i32) {
    %c0_i32 = arith.constant 0 : i32
    %c0_i32_0 = arith.constant 0 : i32
    %c0_i32_1 = arith.constant 0 : i32
    return %c0_i32, %c0_i32_0 : i32, i32
  }
  func.func @transform_2(%arg0: i32) -> (i32, i32) {
    %c0_i32 = arith.constant 0 : i32
    %c0_i32_0 = arith.constant 0 : i32
    %c0_i32_1 = arith.constant 0 : i32
    return %c0_i32, %c0_i32_0 : i32, i32
  }
  func.func @transform_3(%arg0: i32) -> (i32, i32) {
    %c0_i32 = arith.constant 0 : i32
    %c0_i32_0 = arith.constant 0 : i32
    %c0_i32_1 = arith.constant 0 : i32
    return %c0_i32, %c0_i32_0 : i32, i32
  }
  func.func @transform_4(%arg0: i32) -> (i32, i32) {
    %c0_i32 = arith.constant 0 : i32
    %c0_i32_0 = arith.constant 0 : i32
    %c0_i32_1 = arith.constant 0 : i32
    return %c0_i32, %c0_i32_0 : i32, i32
  }
  func.func @transform_5(%arg0: i32) -> (i32, i32) {
    %c0_i32 = arith.constant 0 : i32
    %c0_i32_0 = arith.constant 0 : i32
    %c0_i32_1 = arith.constant 0 : i32
    return %c0_i32, %c0_i32_0 : i32, i32
  }
  func.func @transform_6(%arg0: i32) -> (i32, i32) {
    %c0_i32 = arith.constant 0 : i32
    %c0_i32_0 = arith.constant 0 : i32
    %c0_i32_1 = arith.constant 0 : i32
    return %c0_i32, %c0_i32_0 : i32, i32
  }
  func.func @transform_7(%arg0: i32) -> (i32, i32) {
    %c0_i32 = arith.constant 0 : i32
    %c0_i32_0 = arith.constant 0 : i32
    %c0_i32_1 = arith.constant 0 : i32
    return %c0_i32, %c0_i32_0 : i32, i32
  }
  func.func @transform_8(%arg0: i32) -> (i32, i32) {
    %c0_i32 = arith.constant 0 : i32
    %c0_i32_0 = arith.constant 0 : i32
    %c0_i32_1 = arith.constant 0 : i32
    return %c0_i32, %c0_i32_0 : i32, i32
  }
  func.func @transform_9(%arg0: i32) -> (i32, i32) {
    %c0_i32 = arith.constant 0 : i32
    %c0_i32_0 = arith.constant 0 : i32
    %c0_i32_1 = arith.constant 0 : i32
    return %c0_i32, %c0_i32_0 : i32, i32
  }
  func.func @transform_10(%arg0: i32) -> (i32, i32) {
    %c0_i32 = arith.constant 0 : i32
    %c0_i32_0 = arith.constant 0 : i32
    %c0_i32_1 = arith.constant 0 : i32
    return %c0_i32, %c0_i32_0 : i32, i32
  }
  func.func @transform_11(%arg0: i32) -> (i32, i32) {
    %c0_i32 = arith.constant 0 : i32
    %c0_i32_0 = arith.constant 0 : i32
    %c0_i32_1 = arith.constant 0 : i32
    return %c0_i32, %c0_i32_0 : i32, i32
  }
  func.func @transform_12(%arg0: i32) -> (i32, i32) {
    %c0_i32 = arith.constant 0 : i32
    %c0_i32_0 = arith.constant 0 : i32
    %c0_i32_1 = arith.constant 0 : i32
    return %c0_i32, %c0_i32_0 : i32, i32
  }
  func.func @transform_13(%arg0: i32) -> (i32, i32) {
    %c0_i32 = arith.constant 0 : i32
    %c0_i32_0 = arith.constant 0 : i32
    %c0_i32_1 = arith.constant 0 : i32
    return %c0_i32, %c0_i32_0 : i32, i32
  }
  func.func @transform_14(%arg0: i32) -> (i32, i32) {
    %c0_i32 = arith.constant 0 : i32
    %c0_i32_0 = arith.constant 0 : i32
    %c0_i32_1 = arith.constant 0 : i32
    return %c0_i32, %c0_i32_0 : i32, i32
  }
  func.func @transform_15(%arg0: i32) -> (i32, i32) {
    %c0_i32 = arith.constant 0 : i32
    %c0_i32_0 = arith.constant 0 : i32
    return %arg0, %c0_i32 : i32, i32
  }
}

</mosaic_0001>

<llo_original>
// kernel: dqn_forward.1
$region0: #{dqn_forward.1}
  #allocation0 [shape = 'u32[]', space=smem, size = 0x4, offset = 0x4, fixed_abs, tag = 'smem constant byte address 0x4 - core index']
  #allocation1 [shape = 'u32[144,128]{1,0:T(1,128)}', space=vmem, size = 0x12000, scoped, tag = 'internal scratch']
  %s0 = inlined_call_operand.vmem [shape: f32[16,8], index: 0, kind: input, shape index: {}]
  %s1 = inlined_call_operand.vmem [shape: bf16[8,256], index: 1, kind: input, shape index: {}]
  %s2 = inlined_call_operand.vmem [shape: f32[1,256], index: 2, kind: input, shape index: {}]
  %s3 = inlined_call_operand.vmem [shape: f32[1,256], index: 3, kind: input, shape index: {}]
  %s4 = inlined_call_operand.vmem [shape: f32[1,256], index: 4, kind: input, shape index: {}]
  %s5 = inlined_call_operand.hbm [shape: bf16[256,512], index: 5, kind: input, shape index: {}]
  %s6 = inlined_call_operand.vmem [shape: f32[1,512], index: 6, kind: input, shape index: {}]
  %s7 = inlined_call_operand.vmem [shape: f32[1,512], index: 7, kind: input, shape index: {}]
  %s8 = inlined_call_operand.vmem [shape: f32[1,512], index: 8, kind: input, shape index: {}]
  %s9 = inlined_call_operand.hbm [shape: bf16[512,256], index: 9, kind: input, shape index: {}]
  %s10 = inlined_call_operand.vmem [shape: f32[1,256], index: 10, kind: input, shape index: {}]
  %s11 = inlined_call_operand.vmem [shape: f32[1,256], index: 11, kind: input, shape index: {}]
  %s12 = inlined_call_operand.vmem [shape: f32[1,256], index: 12, kind: input, shape index: {}]
  %s13 = inlined_call_operand.hbm [shape: bf16[256,128], index: 13, kind: input, shape index: {}]
  %s14 = inlined_call_operand.vmem [shape: f32[1,128], index: 14, kind: input, shape index: {}]
  %s15 = inlined_call_operand.vmem [shape: f32[16,128], index: 15, kind: output, shape index: {}]
  %s16 = sld [smem:[#allocation0]]
  $region105: #{dqn_forward.1} parent=0
    _
  %s18 = ssub.s32 1, %s16
  %s19 = scalar_select 0, %s18, %s16
  $region1: #{dqn_forward.1} parent=0
    #allocation2 [shape = 'u8[262144]{0}', space=vmem, size = 0x40000, scoped, tag = 'input window, operand 5, single buffered']
    #allocation3 [shape = 's32[2]{0}', space=sflag, size = 0x8, scoped, tag = 'scoped memory for dqn_forward.1']
    #allocation4 [shape = 'u8[262144]{0}', space=vmem, size = 0x40000, scoped, tag = 'input window, operand 9, single buffered']
    #allocation5 [shape = 's32[1]{0}', space=sflag, size = 0x4, scoped, tag = 'scoped memory for dqn_forward.1']
    #allocation6 [shape = 'u8[65536]{0}', space=vmem, size = 0x10000, scoped, tag = 'input window, operand 13, single buffered']
    %20 = vsyncpa [#allocation3], 0
    %21 = vsyncpa [#allocation5], 0
    loop: start=0, step=1, limit=4
    $region2: #{dqn_forward.1} parent=1 // loop_pre_header
      _
    $region3: #{dqn_forward.1} parent=1 // loop_header
      %s23 = sphi 0, %s27
      %p24 = scmp.ge.s32.totalorder %s23, 4
      %s33 = sphi 0, %s35
      %s36 = sphi 0, %s33
      %s37 = sphi 0, %s36
      %s53 = sphi 0, %s37
      %s57 = sphi 0, %s57
      %s59 = sphi 0, %s57
      %s60 = sphi 0, %s59
      %s74 = sphi 0, %s60
      %s78 = sphi 0, %s78
      %s80 = sphi 0, %s78
      %s81 = sphi 0, %s80
      %s95 = sphi 0, %s81
      %s99 = sphi 0, %s99
      %s101 = sphi 0, %s99
      %s102 = sphi 0, %s101
      %s116 = sphi 0, %s102
      %s120 = sphi 0, %s120
      %s122 = sphi 0, %s120
      %s123 = sphi 0, %s122
      %s137 = sphi 0, %s123
      %s141 = sphi 0, %s141
      %s143 = sphi 0, %s141
      %s144 = sphi 0, %s143
      %s158 = sphi 0, %s144
      %s162 = sphi 0, %s162
      %s164 = sphi 0, %s162
      %s165 = sphi 0, %s164
      %s179 = sphi 0, %s165
      %s183 = sphi 0, %s183
      %s185 = sphi 0, %s183
      %s186 = sphi 0, %s185
      %s200 = sphi 0, %s186
      %s204 = sphi 0, %s204
      %s206 = sphi 0, %s204
      %s207 = sphi 0, %s206
      %s221 = sphi 0, %s207
      %s225 = sphi 0, %s225
      %s227 = sphi 0, %s225
      %s228 = sphi 0, %s227
      %s242 = sphi 0, %s228
      %s246 = sphi 0, %s246
      %s248 = sphi 0, %s246
      %s249 = sphi 0, %s248
      %s263 = sphi 0, %s249
      %s267 = sphi 0, %s267
      %s269 = sphi 0, %s267
      %s270 = sphi 0, %s269
      %s284 = sphi 0, %s270
      %s288 = sphi 0, %s288
      %s290 = sphi 0, %s288
      %s291 = sphi 0, %s290
      %s305 = sphi 0, %s291
      %s309 = sphi 0, %s309
      %s311 = sphi 0, %s309
      %s312 = sphi 0, %s311
      %s326 = sphi 0, %s312
      %s330 = sphi 0, %s330
      %s332 = sphi 0, %s330
      %s333 = sphi 0, %s332
      %s347 = sphi 0, %s333
      %s353 = sphi 0, %s355
      %s356 = sphi 0, %s353
      %s357 = sphi 0, %s356
      %s373 = sphi 0, %s357
    $region4: #{dqn_forward.1} parent=1 // loop_header_branch
      %26 = sbr.rel (%p24) target = $region8
    $region5: #{dqn_forward.1} parent=1 // loop_body
      %s28 = ssub.s32 %s23, 1
      %s29 = ssub.s32 %s23, 2
      %s30 = sadd.s32 %s23, 1
      %s31 = ssub.s32 %s23, %s30
      %p32 = scmp.eq.s32.totalorder %s31, 0
      %s34 = sadd.s32 %s33, 1
      %s35 = scalar_select %p32, %s33, %s34
      %p38 = pneg %p32
      %p39 = scmp.eq.s32.totalorder %s23, 1
      %p40 = por %p38, %p39
      %p41 = scmp.ne.s32.totalorder %s33, %s36
      %p42 = scmp.eq.s32.totalorder %s23, 0
      %p43 = por %p41, %p42
      %p44 = scmp.ne.s32.totalorder %s33, %s36
      %p45 = scmp.eq.s32.totalorder %s28, 1
      %p46 = por %p44, %p45
      %p47 = scmp.ne.s32.totalorder %s36, %s37
      %p48 = scmp.eq.s32.totalorder %s28, 0
      %p49 = por %p47, %p48
      %p50 = scmp.ne.s32.totalorder %s36, %s37
      %p51 = scmp.eq.s32.totalorder %s29, 1
      %p52 = por %p50, %p51
      %p54 = scmp.ne.s32.totalorder %s37, %s53
      %p55 = scmp.eq.s32.totalorder %s29, 0
      %p56 = por %p54, %p55
      %s58 = sadd.s32 %s57, 1
      %p61 = scmp.eq.s32.totalorder %s23, 1
      %p62 = scmp.ne.s32.totalorder %s57, %s59
      %p63 = scmp.eq.s32.totalorder %s23, 0
      %p64 = por %p62, %p63
      %p65 = scmp.ne.s32.totalorder %s57, %s59
      %p66 = scmp.eq.s32.totalorder %s28, 1
      %p67 = por %p65, %p66
      %p68 = scmp.ne.s32.totalorder %s59, %s60
      %p69 = scmp.eq.s32.totalorder %s28, 0
      %p70 = por %p68, %p69
      %p71 = scmp.ne.s32.totalorder %s59, %s60
      %p72 = scmp.eq.s32.totalorder %s29, 1
      %p73 = por %p71, %p72
      %p75 = scmp.ne.s32.totalorder %s60, %s74
      %p76 = scmp.eq.s32.totalorder %s29, 0
      %p77 = por %p75, %p76
      %s79 = sadd.s32 %s78, 1
      %p82 = scmp.eq.s32.totalorder %s23, 1
      %p83 = scmp.ne.s32.totalorder %s78, %s80
      %p84 = scmp.eq.s32.totalorder %s23, 0
      %p85 = por %p83, %p84
      %p86 = scmp.ne.s32.totalorder %s78, %s80
      %p87 = scmp.eq.s32.totalorder %s28, 1
      %p88 = por %p86, %p87
      %p89 = scmp.ne.s32.totalorder %s80, %s81
      %p90 = scmp.eq.s32.totalorder %s28, 0
      %p91 = por %p89, %p90
      %p92 = scmp.ne.s32.totalorder %s80, %s81
      %p93 = scmp.eq.s32.totalorder %s29, 1
      %p94 = por %p92, %p93
      %p96 = scmp.ne.s32.totalorder %s81, %s95
      %p97 = scmp.eq.s32.totalorder %s29, 0
      %p98 = por %p96, %p97
      %s100 = sadd.s32 %s99, 1
      %p103 = scmp.eq.s32.totalorder %s23, 1
      %p104 = scmp.ne.s32.totalorder %s99, %s101
      %p105 = scmp.eq.s32.totalorder %s23, 0
      %p106 = por %p104, %p105
      %p107 = scmp.ne.s32.totalorder %s99, %s101
      %p108 = scmp.eq.s32.totalorder %s28, 1
      %p109 = por %p107, %p108
      %p110 = scmp.ne.s32.totalorder %s101, %s102
      %p111 = scmp.eq.s32.totalorder %s28, 0
      %p112 = por %p110, %p111
      %p113 = scmp.ne.s32.totalorder %s101, %s102
      %p114 = scmp.eq.s32.totalorder %s29, 1
      %p115 = por %p113, %p114
      %p117 = scmp.ne.s32.totalorder %s102, %s116
      %p118 = scmp.eq.s32.totalorder %s29, 0
      %p119 = por %p117, %p118
      %s121 = sadd.s32 %s120, 1
      %p124 = scmp.eq.s32.totalorder %s23, 1
      %p125 = scmp.ne.s32.totalorder %s120, %s122
      %p126 = scmp.eq.s32.totalorder %s23, 0
      %p127 = por %p125, %p126
      %p128 = scmp.ne.s32.totalorder %s120, %s122
      %p129 = scmp.eq.s32.totalorder %s28, 1
      %p130 = por %p128, %p129
      %p131 = scmp.ne.s32.totalorder %s122, %s123
      %p132 = scmp.eq.s32.totalorder %s28, 0
      %p133 = por %p131, %p132
      %p134 = scmp.ne.s32.totalorder %s122, %s123
      %p135 = scmp.eq.s32.totalorder %s29, 1
      %p136 = por %p134, %p135
      %p138 = scmp.ne.s32.totalorder %s123, %s137
      %p139 = scmp.eq.s32.totalorder %s29, 0
      %p140 = por %p138, %p139
      %s142 = sadd.s32 %s141, 1
      %p145 = scmp.eq.s32.totalorder %s23, 1
      %p146 = scmp.ne.s32.totalorder %s141, %s143
      %p147 = scmp.eq.s32.totalorder %s23, 0
      %p148 = por %p146, %p147
      %p149 = scmp.ne.s32.totalorder %s141, %s143
      %p150 = scmp.eq.s32.totalorder %s28, 1
      %p151 = por %p149, %p150
      %p152 = scmp.ne.s32.totalorder %s143, %s144
      %p153 = scmp.eq.s32.totalorder %s28, 0
      %p154 = por %p152, %p153
      %p155 = scmp.ne.s32.totalorder %s143, %s144
      %p156 = scmp.eq.s32.totalorder %s29, 1
      %p157 = por %p155, %p156
      %p159 = scmp.ne.s32.totalorder %s144, %s158
      %p160 = scmp.eq.s32.totalorder %s29, 0
      %p161 = por %p159, %p160
      %s163 = sadd.s32 %s162, 1
      %p166 = scmp.eq.s32.totalorder %s23, 1
      %p167 = scmp.ne.s32.totalorder %s162, %s164
      %p168 = scmp.eq.s32.totalorder %s23, 0
      %p169 = por %p167, %p168
      %p170 = scmp.ne.s32.totalorder %s162, %s164
      %p171 = scmp.eq.s32.totalorder %s28, 1
      %p172 = por %p170, %p171
      %p173 = scmp.ne.s32.totalorder %s164, %s165
      %p174 = scmp.eq.s32.totalorder %s28, 0
      %p175 = por %p173, %p174
      %p176 = scmp.ne.s32.totalorder %s164, %s165
      %p177 = scmp.eq.s32.totalorder %s29, 1
      %p178 = por %p176, %p177
      %p180 = scmp.ne.s32.totalorder %s165, %s179
      %p181 = scmp.eq.s32.totalorder %s29, 0
      %p182 = por %p180, %p181
      %s184 = sadd.s32 %s183, 1
      %p187 = scmp.eq.s32.totalorder %s23, 1
      %p188 = scmp.ne.s32.totalorder %s183, %s185
      %p189 = scmp.eq.s32.totalorder %s23, 0
      %p190 = por %p188, %p189
      %p191 = scmp.ne.s32.totalorder %s183, %s185
      %p192 = scmp.eq.s32.totalorder %s28, 1
      %p193 = por %p191, %p192
      %p194 = scmp.ne.s32.totalorder %s185, %s186
      %p195 = scmp.eq.s32.totalorder %s28, 0
      %p196 = por %p194, %p195
      %p197 = scmp.ne.s32.totalorder %s185, %s186
      %p198 = scmp.eq.s32.totalorder %s29, 1
      %p199 = por %p197, %p198
      %p201 = scmp.ne.s32.totalorder %s186, %s200
      %p202 = scmp.eq.s32.totalorder %s29, 0
      %p203 = por %p201, %p202
      %s205 = sadd.s32 %s204, 1
      %p208 = scmp.eq.s32.totalorder %s23, 1
      %p209 = scmp.ne.s32.totalorder %s204, %s206
      %p210 = scmp.eq.s32.totalorder %s23, 0
      %p211 = por %p209, %p210
      %p212 = scmp.ne.s32.totalorder %s204, %s206
      %p213 = scmp.eq.s32.totalorder %s28, 1
      %p214 = por %p212, %p213
      %p215 = scmp.ne.s32.totalorder %s206, %s207
      %p216 = scmp.eq.s32.totalorder %s28, 0
      %p217 = por %p215, %p216
      %p218 = scmp.ne.s32.totalorder %s206, %s207
      %p219 = scmp.eq.s32.totalorder %s29, 1
      %p220 = por %p218, %p219
      %p222 = scmp.ne.s32.totalorder %s207, %s221
      %p223 = scmp.eq.s32.totalorder %s29, 0
      %p224 = por %p222, %p223
      %s226 = sadd.s32 %s225, 1
      %p229 = scmp.eq.s32.totalorder %s23, 1
      %p230 = scmp.ne.s32.totalorder %s225, %s227
      %p231 = scmp.eq.s32.totalorder %s23, 0
      %p232 = por %p230, %p231
      %p233 = scmp.ne.s32.totalorder %s225, %s227
      %p234 = scmp.eq.s32.totalorder %s28, 1
      %p235 = por %p233, %p234
      %p236 = scmp.ne.s32.totalorder %s227, %s228
      %p237 = scmp.eq.s32.totalorder %s28, 0
      %p238 = por %p236, %p237
      %p239 = scmp.ne.s32.totalorder %s227, %s228
      %p240 = scmp.eq.s32.totalorder %s29, 1
      %p241 = por %p239, %p240
      %p243 = scmp.ne.s32.totalorder %s228, %s242
      %p244 = scmp.eq.s32.totalorder %s29, 0
      %p245 = por %p243, %p244
      %s247 = sadd.s32 %s246, 1
      %p250 = scmp.eq.s32.totalorder %s23, 1
      %p251 = scmp.ne.s32.totalorder %s246, %s248
      %p252 = scmp.eq.s32.totalorder %s23, 0
      %p253 = por %p251, %p252
      %p254 = scmp.ne.s32.totalorder %s246, %s248
      %p255 = scmp.eq.s32.totalorder %s28, 1
      %p256 = por %p254, %p255
      %p257 = scmp.ne.s32.totalorder %s248, %s249
      %p258 = scmp.eq.s32.totalorder %s28, 0
      %p259 = por %p257, %p258
      %p260 = scmp.ne.s32.totalorder %s248, %s249
      %p261 = scmp.eq.s32.totalorder %s29, 1
      %p262 = por %p260, %p261
      %p264 = scmp.ne.s32.totalorder %s249, %s263
      %p265 = scmp.eq.s32.totalorder %s29, 0
      %p266 = por %p264, %p265
      %s268 = sadd.s32 %s267, 1
      %p271 = scmp.eq.s32.totalorder %s23, 1
      %p272 = scmp.ne.s32.totalorder %s267, %s269
      %p273 = scmp.eq.s32.totalorder %s23, 0
      %p274 = por %p272, %p273
      %p275 = scmp.ne.s32.totalorder %s267, %s269
      %p276 = scmp.eq.s32.totalorder %s28, 1
      %p277 = por %p275, %p276
      %p278 = scmp.ne.s32.totalorder %s269, %s270
      %p279 = scmp.eq.s32.totalorder %s28, 0
      %p280 = por %p278, %p279
      %p281 = scmp.ne.s32.totalorder %s269, %s270
      %p282 = scmp.eq.s32.totalorder %s29, 1
      %p283 = por %p281, %p282
      %p285 = scmp.ne.s32.totalorder %s270, %s284
      %p286 = scmp.eq.s32.totalorder %s29, 0
      %p287 = por %p285, %p286
      %s289 = sadd.s32 %s288, 1
      %p292 = scmp.eq.s32.totalorder %s23, 1
      %p293 = scmp.ne.s32.totalorder %s288, %s290
      %p294 = scmp.eq.s32.totalorder %s23, 0
      %p295 = por %p293, %p294
      %p296 = scmp.ne.s32.totalorder %s288, %s290
      %p297 = scmp.eq.s32.totalorder %s28, 1
      %p298 = por %p296, %p297
      %p299 = scmp.ne.s32.totalorder %s290, %s291
      %p300 = scmp.eq.s32.totalorder %s28, 0
      %p301 = por %p299, %p300
      %p302 = scmp.ne.s32.totalorder %s290, %s291
      %p303 = scmp.eq.s32.totalorder %s29, 1
      %p304 = por %p302, %p303
      %p306 = scmp.ne.s32.totalorder %s291, %s305
      %p307 = scmp.eq.s32.totalorder %s29, 0
      %p308 = por %p306, %p307
      %s310 = sadd.s32 %s309, 1
      %p313 = scmp.eq.s32.totalorder %s23, 1
      %p314 = scmp.ne.s32.totalorder %s309, %s311
      %p315 = scmp.eq.s32.totalorder %s23, 0
      %p316 = por %p314, %p315
      %p317 = scmp.ne.s32.totalorder %s309, %s311
      %p318 = scmp.eq.s32.totalorder %s28, 1
      %p319 = por %p317, %p318
      %p320 = scmp.ne.s32.totalorder %s311, %s312
      %p321 = scmp.eq.s32.totalorder %s28, 0
      %p322 = por %p320, %p321
      %p323 = scmp.ne.s32.totalorder %s311, %s312
      %p324 = scmp.eq.s32.totalorder %s29, 1
      %p325 = por %p323, %p324
      %p327 = scmp.ne.s32.totalorder %s312, %s326
      %p328 = scmp.eq.s32.totalorder %s29, 0
      %p329 = por %p327, %p328
      %s331 = sadd.s32 %s330, 1
      %p334 = scmp.eq.s32.totalorder %s23, 1
      %p335 = scmp.ne.s32.totalorder %s330, %s332
      %p336 = scmp.eq.s32.totalorder %s23, 0
      %p337 = por %p335, %p336
      %p338 = scmp.ne.s32.totalorder %s330, %s332
      %p339 = scmp.eq.s32.totalorder %s28, 1
      %p340 = por %p338, %p339
      %p341 = scmp.ne.s32.totalorder %s332, %s333
      %p342 = scmp.eq.s32.totalorder %s28, 0
      %p343 = por %p341, %p342
      %p344 = scmp.ne.s32.totalorder %s332, %s333
      %p345 = scmp.eq.s32.totalorder %s29, 1
      %p346 = por %p344, %p345
      %p348 = scmp.ne.s32.totalorder %s333, %s347
      %p349 = scmp.eq.s32.totalorder %s29, 0
      %p350 = por %p348, %p349
      %s351 = ssub.s32 %s23, %s30
      %p352 = scmp.eq.s32.totalorder %s351, 0
      %s354 = sadd.s32 %s353, 1
      %s355 = scalar_select %p352, %s353, %s354
      %p358 = pneg %p352
      %p359 = scmp.eq.s32.totalorder %s23, 1
      %p360 = por %p358, %p359
      %p361 = scmp.ne.s32.totalorder %s353, %s356
      %p362 = scmp.eq.s32.totalorder %s23, 0
      %p363 = por %p361, %p362
      %p364 = scmp.ne.s32.totalorder %s353, %s356
      %p365 = scmp.eq.s32.totalorder %s28, 1
      %p366 = por %p364, %p365
      %p367 = scmp.ne.s32.totalorder %s356, %s357
      %p368 = scmp.eq.s32.totalorder %s28, 0
      %p369 = por %p367, %p368
      %p370 = scmp.ne.s32.totalorder %s356, %s357
      %p371 = scmp.eq.s32.totalorder %s29, 1
      %p372 = por %p370, %p371
      %p374 = scmp.ne.s32.totalorder %s357, %s373
      %p375 = scmp.eq.s32.totalorder %s29, 0
      %p376 = por %p374, %p375
      %p377 = scmp.le.s32.totalorder 1, %s23
      %p378 = scmp.lt.s32.totalorder %s23, 3
      %p379 = pnand %p377, %p378
      %p380 = pneg %p379
      // Predicated region
      $region9: #{dqn_forward.1} parent=5 // pred_check
        _
      $region10: #{dqn_forward.1} parent=5 // pred_check_branch
        %382 = sbr.rel (%p379) target = $region12
      $region11: #{dqn_forward.1} parent=5 // pred_region
        %s383 = ssub.s32 %s23, 1
        // Predicated region
        $region13: #{dqn_forward.1} parent=11 // pred_check
          %p384 = pneg %p70
        $region14: #{dqn_forward.1} parent=11 // pred_check_branch
          %386 = sbr.rel (%p384) target = $region16
        $region15: #{dqn_forward.1} parent=11 // pred_region
          _
        $region16: #{dqn_forward.1} parent=11 // pred_fallthru
          _
        // Predicated region
        $region17: #{dqn_forward.1} parent=11 // pred_check
          %p387 = pneg %p91
        $region18: #{dqn_forward.1} parent=11 // pred_check_branch
          %389 = sbr.rel (%p387) target = $region20
        $region19: #{dqn_forward.1} parent=11 // pred_region
          _
        $region20: #{dqn_forward.1} parent=11 // pred_fallthru
          _
        // Predicated region
        $region21: #{dqn_forward.1} parent=11 // pred_check
          %p390 = pneg %p112
        $region22: #{dqn_forward.1} parent=11 // pred_check_branch
          %392 = sbr.rel (%p390) target = $region24
        $region23: #{dqn_forward.1} parent=11 // pred_region
          _
        $region24: #{dqn_forward.1} parent=11 // pred_fallthru
          _
        // Predicated region
        $region25: #{dqn_forward.1} parent=11 // pred_check
          %p393 = pneg %p133
        $region26: #{dqn_forward.1} parent=11 // pred_check_branch
          %395 = sbr.rel (%p393) target = $region28
        $region27: #{dqn_forward.1} parent=11 // pred_region
          _
        $region28: #{dqn_forward.1} parent=11 // pred_fallthru
          _
        // Predicated region
        $region29: #{dqn_forward.1} parent=11 // pred_check
          %p396 = pneg %p154
        $region30: #{dqn_forward.1} parent=11 // pred_check_branch
          %398 = sbr.rel (%p396) target = $region32
        $region31: #{dqn_forward.1} parent=11 // pred_region
          %s400 = ssub.s32 8192, 8192
          %401 = vsyncadd [#allocation3], %s400
          %s402 = sshll.u32 [#allocation2], 4
          %s403 = int_to_ptr.vmem [resolvable:$true] %s402
          %408 = dma.hbm_to_vmem [thread:$0]  %s5, 8192, %s403, [#allocation3], 256, 256, 16
        $region32: #{dqn_forward.1} parent=11 // pred_fallthru
          _
        // Predicated region
        $region33: #{dqn_forward.1} parent=11 // pred_check
          %p409 = pneg %p175
        $region34: #{dqn_forward.1} parent=11 // pred_check_branch
          %411 = sbr.rel (%p409) target = $region36
        $region35: #{dqn_forward.1} parent=11 // pred_region
          _
        $region36: #{dqn_forward.1} parent=11 // pred_fallthru
          _
        // Predicated region
        $region37: #{dqn_forward.1} parent=11 // pred_check
          %p412 = pneg %p196
        $region38: #{dqn_forward.1} parent=11 // pred_check_branch
          %414 = sbr.rel (%p412) target = $region40
        $region39: #{dqn_forward.1} parent=11 // pred_region
          _
        $region40: #{dqn_forward.1} parent=11 // pred_fallthru
          _
        // Predicated region
        $region41: #{dqn_forward.1} parent=11 // pred_check
          %p415 = pneg %p217
        $region42: #{dqn_forward.1} parent=11 // pred_check_branch
          %417 = sbr.rel (%p415) target = $region44
        $region43: #{dqn_forward.1} parent=11 // pred_region
          _
        $region44: #{dqn_forward.1} parent=11 // pred_fallthru
          _
        // Predicated region
        $region45: #{dqn_forward.1} parent=11 // pred_check
          %p418 = pneg %p238
        $region46: #{dqn_forward.1} parent=11 // pred_check_branch
          %420 = sbr.rel (%p418) target = $region48
        $region47: #{dqn_forward.1} parent=11 // pred_region
          %s422 = ssub.s32 8192, 8192
          %423 = vsyncadd [#allocation5], %s422
          %s424 = sshll.u32 [#allocation4], 4
          %s425 = int_to_ptr.vmem [resolvable:$true] %s424
          %430 = dma.hbm_to_vmem [thread:$0]  %s9, 8192, %s425, [#allocation5], 128, 128, 8
        $region48: #{dqn_forward.1} parent=11 // pred_fallthru
          _
        // Predicated region
        $region49: #{dqn_forward.1} parent=11 // pred_check
          %p431 = pneg %p259
        $region50: #{dqn_forward.1} parent=11 // pred_check_branch
          %433 = sbr.rel (%p431) target = $region52
        $region51: #{dqn_forward.1} parent=11 // pred_region
          _
        $region52: #{dqn_forward.1} parent=11 // pred_fallthru
          _
        // Predicated region
        $region53: #{dqn_forward.1} parent=11 // pred_check
          %p434 = pneg %p280
        $region54: #{dqn_forward.1} parent=11 // pred_check_branch
          %436 = sbr.rel (%p434) target = $region56
        $region55: #{dqn_forward.1} parent=11 // pred_region
          _
        $region56: #{dqn_forward.1} parent=11 // pred_fallthru
          _
        // Predicated region
        $region57: #{dqn_forward.1} parent=11 // pred_check
          %p437 = pneg %p301
        $region58: #{dqn_forward.1} parent=11 // pred_check_branch
          %439 = sbr.rel (%p437) target = $region60
        $region59: #{dqn_forward.1} parent=11 // pred_region
          _
        $region60: #{dqn_forward.1} parent=11 // pred_fallthru
          _
        // Predicated region
        $region61: #{dqn_forward.1} parent=11 // pred_check
          %p440 = pneg %p322
        $region62: #{dqn_forward.1} parent=11 // pred_check_branch
          %442 = sbr.rel (%p440) target = $region64
        $region63: #{dqn_forward.1} parent=11 // pred_region
          %s444 = ssub.s32 2048, 2048
          %445 = vsyncadd [#allocation5], %s444
          %s446 = sshll.u32 [#allocation6], 4
          %s447 = int_to_ptr.vmem [resolvable:$true] %s446
          %452 = dma.hbm_to_vmem [thread:$0]  %s13, 2048, %s447, [#allocation5], 64, 64, 4
        $region64: #{dqn_forward.1} parent=11 // pred_fallthru
          _
        // Predicated region
        $region65: #{dqn_forward.1} parent=11 // pred_check
          %p453 = pneg %p343
        $region66: #{dqn_forward.1} parent=11 // pred_check_branch
          %455 = sbr.rel (%p453) target = $region68
        $region67: #{dqn_forward.1} parent=11 // pred_region
          _
        $region68: #{dqn_forward.1} parent=11 // pred_fallthru
          _
      $region12: #{dqn_forward.1} parent=5 // pred_fallthru
        _
      %p456 = scmp.lt.s32.totalorder %s23, 2
      // Predicated region
      $region69: #{dqn_forward.1} parent=5 // pred_check
        %p457 = pneg %p456
      $region70: #{dqn_forward.1} parent=5 // pred_check_branch
        %459 = sbr.rel (%p457) target = $region72
      $region71: #{dqn_forward.1} parent=5 // pred_region
        // Predicated region
        $region73: #{dqn_forward.1} parent=71 // pred_check
          %p460 = pneg %p43
        $region74: #{dqn_forward.1} parent=71 // pred_check_branch
          %462 = sbr.rel (%p460) target = $region76
        $region75: #{dqn_forward.1} parent=71 // pred_region
          %p463 = scmp.lt.s32.totalorder %s23, 1
          %s464 = scalar_select %p463, %s23, 1
          %s465 = smul.addr %s464, 8
          %s466 = scalar_lea.vmem %s0, %s465
        $region76: #{dqn_forward.1} parent=71 // pred_fallthru
          _
      $region72: #{dqn_forward.1} parent=5 // pred_fallthru
        _
      %p467 = scmp.le.s32.totalorder 1, %s23
      %p468 = scmp.lt.s32.totalorder %s23, 3
      %p469 = pnand %p467, %p468
      %p470 = pneg %p469
      // Predicated region
      $region77: #{dqn_forward.1} parent=5 // pred_check
        _
      $region78: #{dqn_forward.1} parent=5 // pred_check_branch
        %472 = sbr.rel (%p469) target = $region80
      $region79: #{dqn_forward.1} parent=5 // pred_region
        %s473 = ssub.s32 %s23, 1
        // Predicated region
        $region81: #{dqn_forward.1} parent=79 // pred_check
          %p474 = pneg %p154
        $region82: #{dqn_forward.1} parent=79 // pred_check_branch
          %476 = sbr.rel (%p474) target = $region84
        $region83: #{dqn_forward.1} parent=79 // pred_region
          %477 = dma.done [#allocation3], 8192
        $region84: #{dqn_forward.1} parent=79 // pred_fallthru
          _
        // Predicated region
        $region85: #{dqn_forward.1} parent=79 // pred_check
          %p478 = pneg %p238
        $region86: #{dqn_forward.1} parent=79 // pred_check_branch
          %480 = sbr.rel (%p478) target = $region88
        $region87: #{dqn_forward.1} parent=79 // pred_region
          %481 = dma.done [#allocation5], 8192
        $region88: #{dqn_forward.1} parent=79 // pred_fallthru
          _
        // Predicated region
        $region89: #{dqn_forward.1} parent=79 // pred_check
          %p482 = pneg %p322
        $region90: #{dqn_forward.1} parent=79 // pred_check_branch
          %484 = sbr.rel (%p482) target = $region92
        $region91: #{dqn_forward.1} parent=79 // pred_region
          %485 = dma.done [#allocation5], 2048
        $region92: #{dqn_forward.1} parent=79 // pred_fallthru
          _
        %p486 = scmp.lt.s32.totalorder %s28, 1
        %s487 = scalar_select %p486, %s28, 1
        %s488 = smul.addr %s487, 8
        %s489 = scalar_lea.vmem %s0, %s488
        %p490 = pneg %p49
        %p491 = pneg %p46
        %p492 = pneg %p70
        %p493 = pneg %p67
        %p494 = pneg %p91
        %p495 = pneg %p88
        %p496 = pneg %p112
        %p497 = pneg %p109
        %p498 = pneg %p133
        %p499 = pneg %p130
        %p500 = pneg %p154
        %p501 = pneg %p151
        %p502 = pneg %p175
        %p503 = pneg %p172
        %p504 = pneg %p196
        %p505 = pneg %p193
        %p506 = pneg %p217
        %p507 = pneg %p214
        %p508 = pneg %p238
        %p509 = pneg %p235
        %p510 = pneg %p259
        %p511 = pneg %p256
        %p512 = pneg %p280
        %p513 = pneg %p277
        %p514 = pneg %p301
        %p515 = pneg %p298
        %p516 = pneg %p322
        %p517 = pneg %p319
        %p518 = pneg %p343
        %p519 = pneg %p340
        %p520 = pneg %p369
        %p521 = pneg %p366
        %p522 = scmp.lt.s32.totalorder %s28, 1
        %s523 = scalar_select %p522, %s28, 1
        %s524 = smul.addr %s523, 8
        %s525 = scalar_lea.vmem %s15, %s524
        %p526 = scmp.lt.s32.totalorder %s28, 1
        %s527 = scalar_select %p526, %s28, 1
        %s528 = smul.addr %s527, 8
        %s529 = scalar_lea.vmem %s0, %s528
        %p530 = scmp.lt.s32.totalorder %s28, 1
        %s531 = scalar_select %p530, %s28, 1
        %s532 = smul.addr %s531, 8
        %s533 = scalar_lea.vmem %s15, %s532
        %v535 = vld [vmem:[%s529] sm:$0xff]
        %v536 = vpack.c.bf16 %v535, %v535
        %v537 = vld [vmem:[%s1] sm:$0xff]
        %v538 = vld [vmem:[%s2] sm:$0x3]
        %v540 = vlaneseq
        %v541 = vshrl.u32 %v540, 7
        %v542 = vsub.s32 0, %v541
        %v543 = vrot.slane %v538, %v542
        %v544 = vlaneseq
        %v545 = vshrl.u32 %v544, 7
        %v546 = vsub.s32 1, %v545
        %v547 = vrot.slane %v538, %v546
        %v551 = vunpack.c.l.b16 %v537
        %v552 = vunpack.c.h.b16 %v537
        %v553 = vpack.c.b16 %v551, %v551
        %v554 = vpack.c.b16 %v552, %v552
        %vm555 = vcmask 64512
        %v557 = vsel %vm555, %v536, 0
        %vm559 = vcmask 1043456
        %v561 = vsel %vm559, %v553, 0
        %v564 = vsel %vm559, %v554, 0
        %566 = vmatprep.subr.bf16.mxu0 %v564
        %567 = vmatpush1.bf16.msra.mxu0 %v561
        %568 = vmatprep.subr.bf16.mxu0 0
        %569 = vmatpush1.bf16.msra.mxu0 0
        %570 = vmatprep.subr.bf16.mxu0 0
        %571 = vmatpush1.bf16.msra.mxu0 0
        %572 = vmatprep.subr.bf16.mxu0 0
        %573 = vmatpush1.bf16.msra.mxu0 0
        %574 = vmatprep.subr.bf16.mxu0 0
        %575 = vmatpush1.bf16.msra.mxu0 0
        %576 = vmatprep.subr.bf16.mxu0 0
        %577 = vmatpush1.bf16.msra.mxu0 0
        %578 = vmatprep.subr.bf16.mxu0 0
        %579 = vmatpush1.bf16.msra.mxu0 0
        %580 = vmatprep.subr.bf16.mxu0 0
        %581 = vmatpush1.bf16.msra.mxu0 0
        %582 = vmatprep.subr.bf16.mxu0 0
        %583 = vmatpush1.bf16.msra.mxu0 0
        %584 = vmatprep.subr.bf16.mxu0 0
        %585 = vmatpush1.bf16.msra.mxu0 0
        %586 = vmatprep.subr.bf16.mxu0 0
        %587 = vmatpush1.bf16.msra.mxu0 0
        %588 = vmatprep.subr.bf16.mxu0 0
        %589 = vmatpush1.bf16.msra.mxu0 0
        %590 = vmatprep.subr.bf16.mxu0 0
        %591 = vmatpush1.bf16.msra.mxu0 0
        %592 = vmatprep.subr.bf16.mxu0 0
        %593 = vmatpush1.bf16.msra.mxu0 0
        %594 = vmatprep.subr.bf16.mxu0 0
        %595 = vmatpush1.bf16.msra.mxu0 0
        %596 = vmatprep.subr.bf16.mxu0 0
        %597 = vmatpush1.bf16.msra.mxu0 0
        %598 = vmatprep.mubr.bf16.mxu0 0
        %599 = vmatmul.mubr.bf16.gmra.mrb[0].mxu0 %v557
        %v600 = vpop.f32.mrb[0].mxu0
        %v601 = vadd.f32 %v543, %v600
        %v602 = vpop.f32.mrb[0].mxu0
        %v603 = vadd.f32 %v547, %v602
        %v604 = vpop.f32.mrb[0].mxu0
        %v605 = vpop.f32.mrb[0].mxu0
        %606 = vdwg.mxu0
        %v607 = vld [vmem:[%s3] sm:$0x3]
        %v608 = vld [vmem:[%s4] sm:$0x3]
        %v609 = vadd.f32 %v601, %v603
        %610 = vadd.xlane.f32.xlu0 %v609
        %v611 = vpop.xlane.xlu0 %610
        %v612 = vrcp.pop 256.0
        %v613 = vmul.f32 %v611, %v612
        %v614 = vmul.f32 %v601, %v601
        %v615 = vmul.f32 %v603, %v603
        %v616 = vadd.f32 %v614, %v615
        %617 = vadd.xlane.f32.xlu0 %v616
        %v618 = vpop.xlane.xlu0 %617
        %v619 = vmul.f32 %v618, %v612
        %v620 = vmul.f32 %v613, %v613
        %v621 = vsub.f32 %v619, %v620
        %v622 = vadd.f32 %v621, 1e-05
        %v623 = vrsqrt.pop %v622
        %v624 = vsub.f32 0.0, %v613
        %v625 = vmul.f32 %v624, %v623
        %v626 = vmul.f32 %v601, %v623
        %v627 = vmul.f32 %v603, %v623
        %v628 = vadd.f32 %v626, %v625
        %v629 = vadd.f32 %v627, %v625
        %v631 = vlaneseq
        %v632 = vshrl.u32 %v631, 7
        %v633 = vsub.s32 0, %v632
        %v634 = vrot.slane %v607, %v633
        %v635 = vlaneseq
        %v636 = vshrl.u32 %v635, 7
        %v637 = vsub.s32 1, %v636
        %v638 = vrot.slane %v607, %v637
        %v641 = vmul.f32 %v628, %v634
        %v642 = vmul.f32 %v629, %v638
        %v644 = vlaneseq
        %v645 = vshrl.u32 %v644, 7
        %v646 = vsub.s32 0, %v645
        %v647 = vrot.slane %v608, %v646
        %v648 = vlaneseq
        %v649 = vshrl.u32 %v648, 7
        %v650 = vsub.s32 1, %v649
        %v651 = vrot.slane %v608, %v650
        %v654 = vadd.f32 %v641, %v647
        %v655 = vadd.f32 %v642, %v651
        %v656 = vmax.f32 %v654, 0.0
        %v657 = vmax.f32 %v655, 0.0
        %v658 = vpack.c.bf16 %v656, %v656
        %v659 = vpack.c.bf16 %v657, %v657
        %v660 = vld [vmem:[#allocation2] sm:$0xff]
        %v661 = vld [vmem:[#allocation2 + $0x8] sm:$0xff]
        %v662 = vld [vmem:[#allocation2 + $0x10] sm:$0xff]
        %v663 = vld [vmem:[#allocation2 + $0x18] sm:$0xff]
        %v664 = vld [vmem:[#allocation2 + $0x20] sm:$0xff]
        %v665 = vld [vmem:[#allocation2 + $0x28] sm:$0xff]
        %v666 = vld [vmem:[#allocation2 + $0x30] sm:$0xff]
        %v667 = vld [vmem:[#allocation2 + $0x38] sm:$0xff]
        %v668 = vld [vmem:[#allocation2 + $0x40] sm:$0xff]
        %v669 = vld [vmem:[#allocation2 + $0x48] sm:$0xff]
        %v670 = vld [vmem:[#allocation2 + $0x50] sm:$0xff]
        %v671 = vld [vmem:[#allocation2 + $0x58] sm:$0xff]
        %v672 = vld [vmem:[#allocation2 + $0x60] sm:$0xff]
        %v673 = vld [vmem:[#allocation2 + $0x68] sm:$0xff]
        %v674 = vld [vmem:[#allocation2 + $0x70] sm:$0xff]
        %v675 = vld [vmem:[#allocation2 + $0x78] sm:$0xff]
        %v676 = vld [vmem:[#allocation2 + $0x80] sm:$0xff]
        %v677 = vld [vmem:[#allocation2 + $0x88] sm:$0xff]
        %v678 = vld [vmem:[#allocation2 + $0x90] sm:$0xff]
        %v679 = vld [vmem:[#allocation2 + $0x98] sm:$0xff]
        %v680 = vld [vmem:[#allocation2 + $0xa0] sm:$0xff]
        %v681 = vld [vmem:[#allocation2 + $0xa8] sm:$0xff]
        %v682 = vld [vmem:[#allocation2 + $0xb0] sm:$0xff]
        %v683 = vld [vmem:[#allocation2 + $0xb8] sm:$0xff]
        %v684 = vld [vmem:[#allocation2 + $0xc0] sm:$0xff]
        %v685 = vld [vmem:[#allocation2 + $0xc8] sm:$0xff]
        %v686 = vld [vmem:[#allocation2 + $0xd0] sm:$0xff]
        %v687 = vld [vmem:[#allocation2 + $0xd8] sm:$0xff]
        %v688 = vld [vmem:[#allocation2 + $0xe0] sm:$0xff]
        %v689 = vld [vmem:[#allocation2 + $0xe8] sm:$0xff]
        %v690 = vld [vmem:[#allocation2 + $0xf0] sm:$0xff]
        %v691 = vld [vmem:[#allocation2 + $0xf8] sm:$0xff]
        %v692 = vld [vmem:[#allocation2 + $0x100] sm:$0xff]
        %v693 = vld [vmem:[#allocation2 + $0x108] sm:$0xff]
        %v694 = vld [vmem:[#allocation2 + $0x110] sm:$0xff]
        %v695 = vld [vmem:[#allocation2 + $0x118] sm:$0xff]
        %v696 = vld [vmem:[#allocation2 + $0x120] sm:$0xff]
        %v697 = vld [vmem:[#allocation2 + $0x128] sm:$0xff]
        %v698 = vld [vmem:[#allocation2 + $0x130] sm:$0xff]
        %v699 = vld [vmem:[#allocation2 + $0x138] sm:$0xff]
        %v700 = vld [vmem:[#allocation2 + $0x140] sm:$0xff]
        %v701 = vld [vmem:[#allocation2 + $0x148] sm:$0xff]
        %v702 = vld [vmem:[#allocation2 + $0x150] sm:$0xff]
        %v703 = vld [vmem:[#allocation2 + $0x158] sm:$0xff]
        %v704 = vld [vmem:[#allocation2 + $0x160] sm:$0xff]
        %v705 = vld [vmem:[#allocation2 + $0x168] sm:$0xff]
        %v706 = vld [vmem:[#allocation2 + $0x170] sm:$0xff]
        %v707 = vld [vmem:[#allocation2 + $0x178] sm:$0xff]
        %v708 = vld [vmem:[#allocation2 + $0x180] sm:$0xff]
        %v709 = vld [vmem:[#allocation2 + $0x188] sm:$0xff]
        %v710 = vld [vmem:[#allocation2 + $0x190] sm:$0xff]
        %v711 = vld [vmem:[#allocation2 + $0x198] sm:$0xff]
        %v712 = vld [vmem:[#allocation2 + $0x1a0] sm:$0xff]
        %v713 = vld [vmem:[#allocation2 + $0x1a8] sm:$0xff]
        %v714 = vld [vmem:[#allocation2 + $0x1b0] sm:$0xff]
        %v715 = vld [vmem:[#allocation2 + $0x1b8] sm:$0xff]
        %v716 = vld [vmem:[#allocation2 + $0x1c0] sm:$0xff]
        %v717 = vld [vmem:[#allocation2 + $0x1c8] sm:$0xff]
        %v718 = vld [vmem:[#allocation2 + $0x1d0] sm:$0xff]
        %v719 = vld [vmem:[#allocation2 + $0x1d8] sm:$0xff]
        %v720 = vld [vmem:[#allocation2 + $0x1e0] sm:$0xff]
        %v721 = vld [vmem:[#allocation2 + $0x1e8] sm:$0xff]
        %v722 = vld [vmem:[#allocation2 + $0x1f0] sm:$0xff]
        %v723 = vld [vmem:[#allocation2 + $0x1f8] sm:$0xff]
        %v724 = vld [vmem:[%s6] sm:$0xf]
        %v726 = vlaneseq
        %v727 = vshrl.u32 %v726, 7
        %v728 = vsub.s32 0, %v727
        %v729 = vrot.slane %v724, %v728
        %v730 = vlaneseq
        %v731 = vshrl.u32 %v730, 7
        %v732 = vsub.s32 1, %v731
        %v733 = vrot.slane %v724, %v732
        %v734 = vlaneseq
        %v735 = vshrl.u32 %v734, 7
        %v736 = vsub.s32 2, %v735
        %v737 = vrot.slane %v724, %v736
        %v738 = vlaneseq
        %v739 = vshrl.u32 %v738, 7
        %v740 = vsub.s32 3, %v739
        %v741 = vrot.slane %v724, %v740
        %v810 = vunpack.c.l.b16 %v660
        %v811 = vunpack.c.h.b16 %v660
        %v812 = vunpack.c.l.b16 %v661
        %v813 = vunpack.c.h.b16 %v661
        %v814 = vunpack.c.l.b16 %v662
        %v815 = vunpack.c.h.b16 %v662
        %v816 = vunpack.c.l.b16 %v663
        %v817 = vunpack.c.h.b16 %v663
        %v818 = vunpack.c.l.b16 %v664
        %v819 = vunpack.c.h.b16 %v664
        %v820 = vunpack.c.l.b16 %v665
        %v821 = vunpack.c.h.b16 %v665
        %v822 = vunpack.c.l.b16 %v666
        %v823 = vunpack.c.h.b16 %v666
        %v824 = vunpack.c.l.b16 %v667
        %v825 = vunpack.c.h.b16 %v667
        %v826 = vunpack.c.l.b16 %v668
        %v827 = vunpack.c.h.b16 %v668
        %v828 = vunpack.c.l.b16 %v669
        %v829 = vunpack.c.h.b16 %v669
        %v830 = vunpack.c.l.b16 %v670
        %v831 = vunpack.c.h.b16 %v670
        %v832 = vunpack.c.l.b16 %v671
        %v833 = vunpack.c.h.b16 %v671
        %v834 = vunpack.c.l.b16 %v672
        %v835 = vunpack.c.h.b16 %v672
        %v836 = vunpack.c.l.b16 %v673
        %v837 = vunpack.c.h.b16 %v673
        %v838 = vunpack.c.l.b16 %v674
        %v839 = vunpack.c.h.b16 %v674
        %v840 = vunpack.c.l.b16 %v675
        %v841 = vunpack.c.h.b16 %v675
        %v842 = vunpack.c.l.b16 %v676
        %v843 = vunpack.c.h.b16 %v676
        %v844 = vunpack.c.l.b16 %v677
        %v845 = vunpack.c.h.b16 %v677
        %v846 = vunpack.c.l.b16 %v678
        %v847 = vunpack.c.h.b16 %v678
        %v848 = vunpack.c.l.b16 %v679
        %v849 = vunpack.c.h.b16 %v679
        %v850 = vunpack.c.l.b16 %v680
        %v851 = vunpack.c.h.b16 %v680
        %v852 = vunpack.c.l.b16 %v681
        %v853 = vunpack.c.h.b16 %v681
        %v854 = vunpack.c.l.b16 %v682
        %v855 = vunpack.c.h.b16 %v682
        %v856 = vunpack.c.l.b16 %v683
        %v857 = vunpack.c.h.b16 %v683
        %v858 = vunpack.c.l.b16 %v684
        %v859 = vunpack.c.h.b16 %v684
        %v860 = vunpack.c.l.b16 %v685
        %v861 = vunpack.c.h.b16 %v685
        %v862 = vunpack.c.l.b16 %v686
        %v863 = vunpack.c.h.b16 %v686
        %v864 = vunpack.c.l.b16 %v687
        %v865 = vunpack.c.h.b16 %v687
        %v866 = vunpack.c.l.b16 %v688
        %v867 = vunpack.c.h.b16 %v688
        %v868 = vunpack.c.l.b16 %v689
        %v869 = vunpack.c.h.b16 %v689
        %v870 = vunpack.c.l.b16 %v690
        %v871 = vunpack.c.h.b16 %v690
        %v872 = vunpack.c.l.b16 %v691
        %v873 = vunpack.c.h.b16 %v691
        %v874 = vunpack.c.l.b16 %v692
        %v875 = vunpack.c.h.b16 %v692
        %v876 = vunpack.c.l.b16 %v693
        %v877 = vunpack.c.h.b16 %v693
        %v878 = vunpack.c.l.b16 %v694
        %v879 = vunpack.c.h.b16 %v694
        %v880 = vunpack.c.l.b16 %v695
        %v881 = vunpack.c.h.b16 %v695
        %v882 = vunpack.c.l.b16 %v696
        %v883 = vunpack.c.h.b16 %v696
        %v884 = vunpack.c.l.b16 %v697
        %v885 = vunpack.c.h.b16 %v697
        %v886 = vunpack.c.l.b16 %v698
        %v887 = vunpack.c.h.b16 %v698
        %v888 = vunpack.c.l.b16 %v699
        %v889 = vunpack.c.h.b16 %v699
        %v890 = vunpack.c.l.b16 %v700
        %v891 = vunpack.c.h.b16 %v700
        %v892 = vunpack.c.l.b16 %v701
        %v893 = vunpack.c.h.b16 %v701
        %v894 = vunpack.c.l.b16 %v702
        %v895 = vunpack.c.h.b16 %v702
        %v896 = vunpack.c.l.b16 %v703
        %v897 = vunpack.c.h.b16 %v703
        %v898 = vunpack.c.l.b16 %v704
        %v899 = vunpack.c.h.b16 %v704
        %v900 = vunpack.c.l.b16 %v705
        %v901 = vunpack.c.h.b16 %v705
        %v902 = vunpack.c.l.b16 %v706
        %v903 = vunpack.c.h.b16 %v706
        %v904 = vunpack.c.l.b16 %v707
        %v905 = vunpack.c.h.b16 %v707
        %v906 = vunpack.c.l.b16 %v708
        %v907 = vunpack.c.h.b16 %v708
        %v908 = vunpack.c.l.b16 %v709
        %v909 = vunpack.c.h.b16 %v709
        %v910 = vunpack.c.l.b16 %v710
        %v911 = vunpack.c.h.b16 %v710
        %v912 = vunpack.c.l.b16 %v711
        %v913 = vunpack.c.h.b16 %v711
        %v914 = vunpack.c.l.b16 %v712
        %v915 = vunpack.c.h.b16 %v712
        %v916 = vunpack.c.l.b16 %v713
        %v917 = vunpack.c.h.b16 %v713
        %v918 = vunpack.c.l.b16 %v714
        %v919 = vunpack.c.h.b16 %v714
        %v920 = vunpack.c.l.b16 %v715
        %v921 = vunpack.c.h.b16 %v715
        %v922 = vunpack.c.l.b16 %v716
        %v923 = vunpack.c.h.b16 %v716
        %v924 = vunpack.c.l.b16 %v717
        %v925 = vunpack.c.h.b16 %v717
        %v926 = vunpack.c.l.b16 %v718
        %v927 = vunpack.c.h.b16 %v718
        %v928 = vunpack.c.l.b16 %v719
        %v929 = vunpack.c.h.b16 %v719
        %v930 = vunpack.c.l.b16 %v720
        %v931 = vunpack.c.h.b16 %v720
        %v932 = vunpack.c.l.b16 %v721
        %v933 = vunpack.c.h.b16 %v721
        %v934 = vunpack.c.l.b16 %v722
        %v935 = vunpack.c.h.b16 %v722
        %v936 = vunpack.c.l.b16 %v723
        %v937 = vunpack.c.h.b16 %v723
        %v938 = vpack.c.b16 %v814, %v810
        %v939 = vpack.c.b16 %v815, %v811
        %v940 = vpack.c.b16 %v816, %v812
        %v941 = vpack.c.b16 %v817, %v813
        %v942 = vpack.c.b16 %v822, %v818
        %v943 = vpack.c.b16 %v823, %v819
        %v944 = vpack.c.b16 %v824, %v820
        %v945 = vpack.c.b16 %v825, %v821
        %v946 = vpack.c.b16 %v830, %v826
        %v947 = vpack.c.b16 %v831, %v827
        %v948 = vpack.c.b16 %v832, %v828
        %v949 = vpack.c.b16 %v833, %v829
        %v950 = vpack.c.b16 %v838, %v834
        %v951 = vpack.c.b16 %v839, %v835
        %v952 = vpack.c.b16 %v840, %v836
        %v953 = vpack.c.b16 %v841, %v837
        %v954 = vpack.c.b16 %v846, %v842
        %v955 = vpack.c.b16 %v847, %v843
        %v956 = vpack.c.b16 %v848, %v844
        %v957 = vpack.c.b16 %v849, %v845
        %v958 = vpack.c.b16 %v854, %v850
        %v959 = vpack.c.b16 %v855, %v851
        %v960 = vpack.c.b16 %v856, %v852
        %v961 = vpack.c.b16 %v857, %v853
        %v962 = vpack.c.b16 %v862, %v858
        %v963 = vpack.c.b16 %v863, %v859
        %v964 = vpack.c.b16 %v864, %v860
        %v965 = vpack.c.b16 %v865, %v861
        %v966 = vpack.c.b16 %v870, %v866
        %v967 = vpack.c.b16 %v871, %v867
        %v968 = vpack.c.b16 %v872, %v868
        %v969 = vpack.c.b16 %v873, %v869
        %v970 = vpack.c.b16 %v878, %v874
        %v971 = vpack.c.b16 %v879, %v875
        %v972 = vpack.c.b16 %v880, %v876
        %v973 = vpack.c.b16 %v881, %v877
        %v974 = vpack.c.b16 %v886, %v882
        %v975 = vpack.c.b16 %v887, %v883
        %v976 = vpack.c.b16 %v888, %v884
        %v977 = vpack.c.b16 %v889, %v885
        %v978 = vpack.c.b16 %v894, %v890
        %v979 = vpack.c.b16 %v895, %v891
        %v980 = vpack.c.b16 %v896, %v892
        %v981 = vpack.c.b16 %v897, %v893
        %v982 = vpack.c.b16 %v902, %v898
        %v983 = vpack.c.b16 %v903, %v899
        %v984 = vpack.c.b16 %v904, %v900
        %v985 = vpack.c.b16 %v905, %v901
        %v986 = vpack.c.b16 %v910, %v906
        %v987 = vpack.c.b16 %v911, %v907
        %v988 = vpack.c.b16 %v912, %v908
        %v989 = vpack.c.b16 %v913, %v909
        %v990 = vpack.c.b16 %v918, %v914
        %v991 = vpack.c.b16 %v919, %v915
        %v992 = vpack.c.b16 %v920, %v916
        %v993 = vpack.c.b16 %v921, %v917
        %v994 = vpack.c.b16 %v926, %v922
        %v995 = vpack.c.b16 %v927, %v923
        %v996 = vpack.c.b16 %v928, %v924
        %v997 = vpack.c.b16 %v929, %v925
        %v998 = vpack.c.b16 %v934, %v930
        %v999 = vpack.c.b16 %v935, %v931
        %v1000 = vpack.c.b16 %v936, %v932
        %v1001 = vpack.c.b16 %v937, %v933
        %1066 = vmatprep.subr.bf16.mxu0 %v939
        %1067 = vmatpush1.bf16.msra.mxu0 %v938
        %1068 = vmatprep.subr.bf16.mxu0 %v943
        %1069 = vmatpush1.bf16.msra.mxu0 %v942
        %1070 = vmatprep.subr.bf16.mxu0 %v947
        %1071 = vmatpush1.bf16.msra.mxu0 %v946
        %1072 = vmatprep.subr.bf16.mxu0 %v951
        %1073 = vmatpush1.bf16.msra.mxu0 %v950
        %1074 = vmatprep.subr.bf16.mxu0 %v955
        %1075 = vmatpush1.bf16.msra.mxu0 %v954
        %1076 = vmatprep.subr.bf16.mxu0 %v959
        %1077 = vmatpush1.bf16.msra.mxu0 %v958
        %1078 = vmatprep.subr.bf16.mxu0 %v963
        %1079 = vmatpush1.bf16.msra.mxu0 %v962
        %1080 = vmatprep.subr.bf16.mxu0 %v967
        %1081 = vmatpush1.bf16.msra.mxu0 %v966
        %1082 = vmatprep.subr.bf16.mxu0 %v971
        %1083 = vmatpush1.bf16.msra.mxu0 %v970
        %1084 = vmatprep.subr.bf16.mxu0 %v975
        %1085 = vmatpush1.bf16.msra.mxu0 %v974
        %1086 = vmatprep.subr.bf16.mxu0 %v979
        %1087 = vmatpush1.bf16.msra.mxu0 %v978
        %1088 = vmatprep.subr.bf16.mxu0 %v983
        %1089 = vmatpush1.bf16.msra.mxu0 %v982
        %1090 = vmatprep.subr.bf16.mxu0 %v987
        %1091 = vmatpush1.bf16.msra.mxu0 %v986
        %1092 = vmatprep.subr.bf16.mxu0 %v991
        %1093 = vmatpush1.bf16.msra.mxu0 %v990
        %1094 = vmatprep.subr.bf16.mxu0 %v995
        %1095 = vmatpush1.bf16.msra.mxu0 %v994
        %1096 = vmatprep.subr.bf16.mxu0 %v999
        %1097 = vmatpush1.bf16.msra.mxu0 %v998
        %1098 = vmatprep.mubr.bf16.mxu0 %v659
        %1099 = vmatmul.mubr.bf16.gmra.mrb[0].mxu0 %v658
        %v1100 = vpop.f32.mrb[0].mxu0
        %v1101 = vadd.f32 %v729, %v1100
        %v1102 = vpop.f32.mrb[0].mxu0
        %v1103 = vadd.f32 %v733, %v1102
        %v1104 = vpop.f32.mrb[0].mxu0
        %v1105 = vpop.f32.mrb[0].mxu0
        %1106 = vdwg.mxu0
        %1107 = vmatprep.subr.bf16.mxu0 %v941
        %1108 = vmatpush1.bf16.msra.mxu0 %v940
        %1109 = vmatprep.subr.bf16.mxu0 %v945
        %1110 = vmatpush1.bf16.msra.mxu0 %v944
        %1111 = vmatprep.subr.bf16.mxu0 %v949
        %1112 = vmatpush1.bf16.msra.mxu0 %v948
        %1113 = vmatprep.subr.bf16.mxu0 %v953
        %1114 = vmatpush1.bf16.msra.mxu0 %v952
        %1115 = vmatprep.subr.bf16.mxu0 %v957
        %1116 = vmatpush1.bf16.msra.mxu0 %v956
        %1117 = vmatprep.subr.bf16.mxu0 %v961
        %1118 = vmatpush1.bf16.msra.mxu0 %v960
        %1119 = vmatprep.subr.bf16.mxu0 %v965
        %1120 = vmatpush1.bf16.msra.mxu0 %v964
        %1121 = vmatprep.subr.bf16.mxu0 %v969
        %1122 = vmatpush1.bf16.msra.mxu0 %v968
        %1123 = vmatprep.subr.bf16.mxu0 %v973
        %1124 = vmatpush1.bf16.msra.mxu0 %v972
        %1125 = vmatprep.subr.bf16.mxu0 %v977
        %1126 = vmatpush1.bf16.msra.mxu0 %v976
        %1127 = vmatprep.subr.bf16.mxu0 %v981
        %1128 = vmatpush1.bf16.msra.mxu0 %v980
        %1129 = vmatprep.subr.bf16.mxu0 %v985
        %1130 = vmatpush1.bf16.msra.mxu0 %v984
        %1131 = vmatprep.subr.bf16.mxu0 %v989
        %1132 = vmatpush1.bf16.msra.mxu0 %v988
        %1133 = vmatprep.subr.bf16.mxu0 %v993
        %1134 = vmatpush1.bf16.msra.mxu0 %v992
        %1135 = vmatprep.subr.bf16.mxu0 %v997
        %1136 = vmatpush1.bf16.msra.mxu0 %v996
        %1137 = vmatprep.subr.bf16.mxu0 %v1001
        %1138 = vmatpush1.bf16.msra.mxu0 %v1000
        %1139 = vmatprep.mubr.bf16.mxu0 %v659
        %1140 = vmatmul.mubr.bf16.gmra.mrb[0].mxu0 %v658
        %v1141 = vpop.f32.mrb[0].mxu0
        %v1142 = vadd.f32 %v737, %v1141
        %v1143 = vpop.f32.mrb[0].mxu0
        %v1144 = vadd.f32 %v741, %v1143
        %v1145 = vpop.f32.mrb[0].mxu0
        %v1146 = vpop.f32.mrb[0].mxu0
        %1147 = vdwg.mxu0
        %v1148 = vld [vmem:[%s7] sm:$0xf]
        %v1149 = vld [vmem:[%s8] sm:$0xf]
        %v1150 = vadd.f32 %v1101, %v1103
        %v1151 = vadd.f32 %v1150, %v1142
        %v1152 = vadd.f32 %v1151, %v1144
        %1153 = vadd.xlane.f32.xlu0 %v1152
        %v1154 = vpop.xlane.xlu0 %1153
        %v1155 = vrcp.pop 512.0
        %v1156 = vmul.f32 %v1154, %v1155
        %v1157 = vmul.f32 %v1101, %v1101
        %v1158 = vmul.f32 %v1103, %v1103
        %v1159 = vmul.f32 %v1142, %v1142
        %v1160 = vmul.f32 %v1144, %v1144
        %v1161 = vadd.f32 %v1157, %v1158
        %v1162 = vadd.f32 %v1161, %v1159
        %v1163 = vadd.f32 %v1162, %v1160
        %1164 = vadd.xlane.f32.xlu0 %v1163
        %v1165 = vpop.xlane.xlu0 %1164
        %v1166 = vmul.f32 %v1165, %v1155
        %v1167 = vmul.f32 %v1156, %v1156
        %v1168 = vsub.f32 %v1166, %v1167
        %v1169 = vadd.f32 %v1168, 1e-05
        %v1170 = vrsqrt.pop %v1169
        %v1171 = vsub.f32 0.0, %v1156
        %v1172 = vmul.f32 %v1171, %v1170
        %v1173 = vmul.f32 %v1101, %v1170
        %v1174 = vmul.f32 %v1103, %v1170
        %v1175 = vmul.f32 %v1142, %v1170
        %v1176 = vmul.f32 %v1144, %v1170
        %v1177 = vadd.f32 %v1173, %v1172
        %v1178 = vadd.f32 %v1174, %v1172
        %v1179 = vadd.f32 %v1175, %v1172
        %v1180 = vadd.f32 %v1176, %v1172
        %v1182 = vlaneseq
        %v1183 = vshrl.u32 %v1182, 7
        %v1184 = vsub.s32 0, %v1183
        %v1185 = vrot.slane %v1148, %v1184
        %v1186 = vlaneseq
        %v1187 = vshrl.u32 %v1186, 7
        %v1188 = vsub.s32 1, %v1187
        %v1189 = vrot.slane %v1148, %v1188
        %v1190 = vlaneseq
        %v1191 = vshrl.u32 %v1190, 7
        %v1192 = vsub.s32 2, %v1191
        %v1193 = vrot.slane %v1148, %v1192
        %v1194 = vlaneseq
        %v1195 = vshrl.u32 %v1194, 7
        %v1196 = vsub.s32 3, %v1195
        %v1197 = vrot.slane %v1148, %v1196
        %v1202 = vmul.f32 %v1177, %v1185
        %v1203 = vmul.f32 %v1178, %v1189
        %v1204 = vmul.f32 %v1179, %v1193
        %v1205 = vmul.f32 %v1180, %v1197
        %v1207 = vlaneseq
        %v1208 = vshrl.u32 %v1207, 7
        %v1209 = vsub.s32 0, %v1208
        %v1210 = vrot.slane %v1149, %v1209
        %v1211 = vlaneseq
        %v1212 = vshrl.u32 %v1211, 7
        %v1213 = vsub.s32 1, %v1212
        %v1214 = vrot.slane %v1149, %v1213
        %v1215 = vlaneseq
        %v1216 = vshrl.u32 %v1215, 7
        %v1217 = vsub.s32 2, %v1216
        %v1218 = vrot.slane %v1149, %v1217
        %v1219 = vlaneseq
        %v1220 = vshrl.u32 %v1219, 7
        %v1221 = vsub.s32 3, %v1220
        %v1222 = vrot.slane %v1149, %v1221
        %v1227 = vadd.f32 %v1202, %v1210
        %v1228 = vadd.f32 %v1203, %v1214
        %v1229 = vadd.f32 %v1204, %v1218
        %v1230 = vadd.f32 %v1205, %v1222
        %v1231 = vmax.f32 %v1227, 0.0
        %v1232 = vmax.f32 %v1228, 0.0
        %v1233 = vmax.f32 %v1229, 0.0
        %v1234 = vmax.f32 %v1230, 0.0
        %v1235 = vpack.c.bf16 %v1231, %v1231
        %v1236 = vpack.c.bf16 %v1232, %v1232
        %v1237 = vpack.c.bf16 %v1233, %v1233
        %v1238 = vpack.c.bf16 %v1234, %v1234
        %v1239 = vld [vmem:[#allocation4] sm:$0xff]
        %v1240 = vld [vmem:[#allocation4 + $0x8] sm:$0xff]
        %v1241 = vld [vmem:[#allocation4 + $0x10] sm:$0xff]
        %v1242 = vld [vmem:[#allocation4 + $0x18] sm:$0xff]
        %v1243 = vld [vmem:[#allocation4 + $0x20] sm:$0xff]
        %v1244 = vld [vmem:[#allocation4 + $0x28] sm:$0xff]
        %v1245 = vld [vmem:[#allocation4 + $0x30] sm:$0xff]
        %v1246 = vld [vmem:[#allocation4 + $0x38] sm:$0xff]
        %v1247 = vld [vmem:[#allocation4 + $0x40] sm:$0xff]
        %v1248 = vld [vmem:[#allocation4 + $0x48] sm:$0xff]
        %v1249 = vld [vmem:[#allocation4 + $0x50] sm:$0xff]
        %v1250 = vld [vmem:[#allocation4 + $0x58] sm:$0xff]
        %v1251 = vld [vmem:[#allocation4 + $0x60] sm:$0xff]
        %v1252 = vld [vmem:[#allocation4 + $0x68] sm:$0xff]
        %v1253 = vld [vmem:[#allocation4 + $0x70] sm:$0xff]
        %v1254 = vld [vmem:[#allocation4 + $0x78] sm:$0xff]
        %v1255 = vld [vmem:[#allocation4 + $0x80] sm:$0xff]
        %v1256 = vld [vmem:[#allocation4 + $0x88] sm:$0xff]
        %v1257 = vld [vmem:[#allocation4 + $0x90] sm:$0xff]
        %v1258 = vld [vmem:[#allocation4 + $0x98] sm:$0xff]
        %v1259 = vld [vmem:[#allocation4 + $0xa0] sm:$0xff]
        %v1260 = vld [vmem:[#allocation4 + $0xa8] sm:$0xff]
        %v1261 = vld [vmem:[#allocation4 + $0xb0] sm:$0xff]
        %v1262 = vld [vmem:[#allocation4 + $0xb8] sm:$0xff]
        %v1263 = vld [vmem:[#allocation4 + $0xc0] sm:$0xff]
        %v1264 = vld [vmem:[#allocation4 + $0xc8] sm:$0xff]
        %v1265 = vld [vmem:[#allocation4 + $0xd0] sm:$0xff]
        %v1266 = vld [vmem:[#allocation4 + $0xd8] sm:$0xff]
        %v1267 = vld [vmem:[#allocation4 + $0xe0] sm:$0xff]
        %v1268 = vld [vmem:[#allocation4 + $0xe8] sm:$0xff]
        %v1269 = vld [vmem:[#allocation4 + $0xf0] sm:$0xff]
        %v1270 = vld [vmem:[#allocation4 + $0xf8] sm:$0xff]
        %v1271 = vld [vmem:[#allocation4 + $0x100] sm:$0xff]
        %v1272 = vld [vmem:[#allocation4 + $0x108] sm:$0xff]
        %v1273 = vld [vmem:[#allocation4 + $0x110] sm:$0xff]
        %v1274 = vld [vmem:[#allocation4 + $0x118] sm:$0xff]
        %v1275 = vld [vmem:[#allocation4 + $0x120] sm:$0xff]
        %v1276 = vld [vmem:[#allocation4 + $0x128] sm:$0xff]
        %v1277 = vld [vmem:[#allocation4 + $0x130] sm:$0xff]
        %v1278 = vld [vmem:[#allocation4 + $0x138] sm:$0xff]
        %v1279 = vld [vmem:[#allocation4 + $0x140] sm:$0xff]
        %v1280 = vld [vmem:[#allocation4 + $0x148] sm:$0xff]
        %v1281 = vld [vmem:[#allocation4 + $0x150] sm:$0xff]
        %v1282 = vld [vmem:[#allocation4 + $0x158] sm:$0xff]
        %v1283 = vld [vmem:[#allocation4 + $0x160] sm:$0xff]
        %v1284 = vld [vmem:[#allocation4 + $0x168] sm:$0xff]
        %v1285 = vld [vmem:[#allocation4 + $0x170] sm:$0xff]
        %v1286 = vld [vmem:[#allocation4 + $0x178] sm:$0xff]
        %v1287 = vld [vmem:[#allocation4 + $0x180] sm:$0xff]
        %v1288 = vld [vmem:[#allocation4 + $0x188] sm:$0xff]
        %v1289 = vld [vmem:[#allocation4 + $0x190] sm:$0xff]
        %v1290 = vld [vmem:[#allocation4 + $0x198] sm:$0xff]
        %v1291 = vld [vmem:[#allocation4 + $0x1a0] sm:$0xff]
        %v1292 = vld [vmem:[#allocation4 + $0x1a8] sm:$0xff]
        %v1293 = vld [vmem:[#allocation4 + $0x1b0] sm:$0xff]
        %v1294 = vld [vmem:[#allocation4 + $0x1b8] sm:$0xff]
        %v1295 = vld [vmem:[#allocation4 + $0x1c0] sm:$0xff]
        %v1296 = vld [vmem:[#allocation4 + $0x1c8] sm:$0xff]
        %v1297 = vld [vmem:[#allocation4 + $0x1d0] sm:$0xff]
        %v1298 = vld [vmem:[#allocation4 + $0x1d8] sm:$0xff]
        %v1299 = vld [vmem:[#allocation4 + $0x1e0] sm:$0xff]
        %v1300 = vld [vmem:[#allocation4 + $0x1e8] sm:$0xff]
        %v1301 = vld [vmem:[#allocation4 + $0x1f0] sm:$0xff]
        %v1302 = vld [vmem:[#allocation4 + $0x1f8] sm:$0xff]
        %v1303 = vld [vmem:[%s10] sm:$0x3]
        %v1305 = vlaneseq
        %v1306 = vshrl.u32 %v1305, 7
        %v1307 = vsub.s32 0, %v1306
        %v1308 = vrot.slane %v1303, %v1307
        %v1309 = vlaneseq
        %v1310 = vshrl.u32 %v1309, 7
        %v1311 = vsub.s32 1, %v1310
        %v1312 = vrot.slane %v1303, %v1311
        %v1379 = vunpack.c.l.b16 %v1239
        %v1380 = vunpack.c.h.b16 %v1239
        %v1381 = vunpack.c.l.b16 %v1240
        %v1382 = vunpack.c.h.b16 %v1240
        %v1383 = vunpack.c.l.b16 %v1241
        %v1384 = vunpack.c.h.b16 %v1241
        %v1385 = vunpack.c.l.b16 %v1242
        %v1386 = vunpack.c.h.b16 %v1242
        %v1387 = vunpack.c.l.b16 %v1243
        %v1388 = vunpack.c.h.b16 %v1243
        %v1389 = vunpack.c.l.b16 %v1244
        %v1390 = vunpack.c.h.b16 %v1244
        %v1391 = vunpack.c.l.b16 %v1245
        %v1392 = vunpack.c.h.b16 %v1245
        %v1393 = vunpack.c.l.b16 %v1246
        %v1394 = vunpack.c.h.b16 %v1246
        %v1395 = vunpack.c.l.b16 %v1247
        %v1396 = vunpack.c.h.b16 %v1247
        %v1397 = vunpack.c.l.b16 %v1248
        %v1398 = vunpack.c.h.b16 %v1248
        %v1399 = vunpack.c.l.b16 %v1249
        %v1400 = vunpack.c.h.b16 %v1249
        %v1401 = vunpack.c.l.b16 %v1250
        %v1402 = vunpack.c.h.b16 %v1250
        %v1403 = vunpack.c.l.b16 %v1251
        %v1404 = vunpack.c.h.b16 %v1251
        %v1405 = vunpack.c.l.b16 %v1252
        %v1406 = vunpack.c.h.b16 %v1252
        %v1407 = vunpack.c.l.b16 %v1253
        %v1408 = vunpack.c.h.b16 %v1253
        %v1409 = vunpack.c.l.b16 %v1254
        %v1410 = vunpack.c.h.b16 %v1254
        %v1411 = vunpack.c.l.b16 %v1255
        %v1412 = vunpack.c.h.b16 %v1255
        %v1413 = vunpack.c.l.b16 %v1256
        %v1414 = vunpack.c.h.b16 %v1256
        %v1415 = vunpack.c.l.b16 %v1257
        %v1416 = vunpack.c.h.b16 %v1257
        %v1417 = vunpack.c.l.b16 %v1258
        %v1418 = vunpack.c.h.b16 %v1258
        %v1419 = vunpack.c.l.b16 %v1259
        %v1420 = vunpack.c.h.b16 %v1259
        %v1421 = vunpack.c.l.b16 %v1260
        %v1422 = vunpack.c.h.b16 %v1260
        %v1423 = vunpack.c.l.b16 %v1261
        %v1424 = vunpack.c.h.b16 %v1261
        %v1425 = vunpack.c.l.b16 %v1262
        %v1426 = vunpack.c.h.b16 %v1262
        %v1427 = vunpack.c.l.b16 %v1263
        %v1428 = vunpack.c.h.b16 %v1263
        %v1429 = vunpack.c.l.b16 %v1264
        %v1430 = vunpack.c.h.b16 %v1264
        %v1431 = vunpack.c.l.b16 %v1265
        %v1432 = vunpack.c.h.b16 %v1265
        %v1433 = vunpack.c.l.b16 %v1266
        %v1434 = vunpack.c.h.b16 %v1266
        %v1435 = vunpack.c.l.b16 %v1267
        %v1436 = vunpack.c.h.b16 %v1267
        %v1437 = vunpack.c.l.b16 %v1268
        %v1438 = vunpack.c.h.b16 %v1268
        %v1439 = vunpack.c.l.b16 %v1269
        %v1440 = vunpack.c.h.b16 %v1269
        %v1441 = vunpack.c.l.b16 %v1270
        %v1442 = vunpack.c.h.b16 %v1270
        %v1443 = vunpack.c.l.b16 %v1271
        %v1444 = vunpack.c.h.b16 %v1271
        %v1445 = vunpack.c.l.b16 %v1272
        %v1446 = vunpack.c.h.b16 %v1272
        %v1447 = vunpack.c.l.b16 %v1273
        %v1448 = vunpack.c.h.b16 %v1273
        %v1449 = vunpack.c.l.b16 %v1274
        %v1450 = vunpack.c.h.b16 %v1274
        %v1451 = vunpack.c.l.b16 %v1275
        %v1452 = vunpack.c.h.b16 %v1275
        %v1453 = vunpack.c.l.b16 %v1276
        %v1454 = vunpack.c.h.b16 %v1276
        %v1455 = vunpack.c.l.b16 %v1277
        %v1456 = vunpack.c.h.b16 %v1277
        %v1457 = vunpack.c.l.b16 %v1278
        %v1458 = vunpack.c.h.b16 %v1278
        %v1459 = vunpack.c.l.b16 %v1279
        %v1460 = vunpack.c.h.b16 %v1279
        %v1461 = vunpack.c.l.b16 %v1280
        %v1462 = vunpack.c.h.b16 %v1280
        %v1463 = vunpack.c.l.b16 %v1281
        %v1464 = vunpack.c.h.b16 %v1281
        %v1465 = vunpack.c.l.b16 %v1282
        %v1466 = vunpack.c.h.b16 %v1282
        %v1467 = vunpack.c.l.b16 %v1283
        %v1468 = vunpack.c.h.b16 %v1283
        %v1469 = vunpack.c.l.b16 %v1284
        %v1470 = vunpack.c.h.b16 %v1284
        %v1471 = vunpack.c.l.b16 %v1285
        %v1472 = vunpack.c.h.b16 %v1285
        %v1473 = vunpack.c.l.b16 %v1286
        %v1474 = vunpack.c.h.b16 %v1286
        %v1475 = vunpack.c.l.b16 %v1287
        %v1476 = vunpack.c.h.b16 %v1287
        %v1477 = vunpack.c.l.b16 %v1288
        %v1478 = vunpack.c.h.b16 %v1288
        %v1479 = vunpack.c.l.b16 %v1289
        %v1480 = vunpack.c.h.b16 %v1289
        %v1481 = vunpack.c.l.b16 %v1290
        %v1482 = vunpack.c.h.b16 %v1290
        %v1483 = vunpack.c.l.b16 %v1291
        %v1484 = vunpack.c.h.b16 %v1291
        %v1485 = vunpack.c.l.b16 %v1292
        %v1486 = vunpack.c.h.b16 %v1292
        %v1487 = vunpack.c.l.b16 %v1293
        %v1488 = vunpack.c.h.b16 %v1293
        %v1489 = vunpack.c.l.b16 %v1294
        %v1490 = vunpack.c.h.b16 %v1294
        %v1491 = vunpack.c.l.b16 %v1295
        %v1492 = vunpack.c.h.b16 %v1295
        %v1493 = vunpack.c.l.b16 %v1296
        %v1494 = vunpack.c.h.b16 %v1296
        %v1495 = vunpack.c.l.b16 %v1297
        %v1496 = vunpack.c.h.b16 %v1297
        %v1497 = vunpack.c.l.b16 %v1298
        %v1498 = vunpack.c.h.b16 %v1298
        %v1499 = vunpack.c.l.b16 %v1299
        %v1500 = vunpack.c.h.b16 %v1299
        %v1501 = vunpack.c.l.b16 %v1300
        %v1502 = vunpack.c.h.b16 %v1300
        %v1503 = vunpack.c.l.b16 %v1301
        %v1504 = vunpack.c.h.b16 %v1301
        %v1505 = vunpack.c.l.b16 %v1302
        %v1506 = vunpack.c.h.b16 %v1302
        %v1507 = vpack.c.b16 %v1381, %v1379
        %v1508 = vpack.c.b16 %v1382, %v1380
        %v1509 = vpack.c.b16 %v1385, %v1383
        %v1510 = vpack.c.b16 %v1386, %v1384
        %v1511 = vpack.c.b16 %v1389, %v1387
        %v1512 = vpack.c.b16 %v1390, %v1388
        %v1513 = vpack.c.b16 %v1393, %v1391
        %v1514 = vpack.c.b16 %v1394, %v1392
        %v1515 = vpack.c.b16 %v1397, %v1395
        %v1516 = vpack.c.b16 %v1398, %v1396
        %v1517 = vpack.c.b16 %v1401, %v1399
        %v1518 = vpack.c.b16 %v1402, %v1400
        %v1519 = vpack.c.b16 %v1405, %v1403
        %v1520 = vpack.c.b16 %v1406, %v1404
        %v1521 = vpack.c.b16 %v1409, %v1407
        %v1522 = vpack.c.b16 %v1410, %v1408
        %v1523 = vpack.c.b16 %v1413, %v1411
        %v1524 = vpack.c.b16 %v1414, %v1412
        %v1525 = vpack.c.b16 %v1417, %v1415
        %v1526 = vpack.c.b16 %v1418, %v1416
        %v1527 = vpack.c.b16 %v1421, %v1419
        %v1528 = vpack.c.b16 %v1422, %v1420
        %v1529 = vpack.c.b16 %v1425, %v1423
        %v1530 = vpack.c.b16 %v1426, %v1424
        %v1531 = vpack.c.b16 %v1429, %v1427
        %v1532 = vpack.c.b16 %v1430, %v1428
        %v1533 = vpack.c.b16 %v1433, %v1431
        %v1534 = vpack.c.b16 %v1434, %v1432
        %v1535 = vpack.c.b16 %v1437, %v1435
        %v1536 = vpack.c.b16 %v1438, %v1436
        %v1537 = vpack.c.b16 %v1441, %v1439
        %v1538 = vpack.c.b16 %v1442, %v1440
        %v1539 = vpack.c.b16 %v1445, %v1443
        %v1540 = vpack.c.b16 %v1446, %v1444
        %v1541 = vpack.c.b16 %v1449, %v1447
        %v1542 = vpack.c.b16 %v1450, %v1448
        %v1543 = vpack.c.b16 %v1453, %v1451
        %v1544 = vpack.c.b16 %v1454, %v1452
        %v1545 = vpack.c.b16 %v1457, %v1455
        %v1546 = vpack.c.b16 %v1458, %v1456
        %v1547 = vpack.c.b16 %v1461, %v1459
        %v1548 = vpack.c.b16 %v1462, %v1460
        %v1549 = vpack.c.b16 %v1465, %v1463
        %v1550 = vpack.c.b16 %v1466, %v1464
        %v1551 = vpack.c.b16 %v1469, %v1467
        %v1552 = vpack.c.b16 %v1470, %v1468
        %v1553 = vpack.c.b16 %v1473, %v1471
        %v1554 = vpack.c.b16 %v1474, %v1472
        %v1555 = vpack.c.b16 %v1477, %v1475
        %v1556 = vpack.c.b16 %v1478, %v1476
        %v1557 = vpack.c.b16 %v1481, %v1479
        %v1558 = vpack.c.b16 %v1482, %v1480
        %v1559 = vpack.c.b16 %v1485, %v1483
        %v1560 = vpack.c.b16 %v1486, %v1484
        %v1561 = vpack.c.b16 %v1489, %v1487
        %v1562 = vpack.c.b16 %v1490, %v1488
        %v1563 = vpack.c.b16 %v1493, %v1491
        %v1564 = vpack.c.b16 %v1494, %v1492
        %v1565 = vpack.c.b16 %v1497, %v1495
        %v1566 = vpack.c.b16 %v1498, %v1496
        %v1567 = vpack.c.b16 %v1501, %v1499
        %v1568 = vpack.c.b16 %v1502, %v1500
        %v1569 = vpack.c.b16 %v1505, %v1503
        %v1570 = vpack.c.b16 %v1506, %v1504
        %1635 = vmatprep.subr.bf16.mxu0 %v1508
        %1636 = vmatpush1.bf16.msra.mxu0 %v1507
        %1637 = vmatprep.subr.bf16.mxu0 %v1510
        %1638 = vmatpush1.bf16.msra.mxu0 %v1509
        %1639 = vmatprep.subr.bf16.mxu0 %v1512
        %1640 = vmatpush1.bf16.msra.mxu0 %v1511
        %1641 = vmatprep.subr.bf16.mxu0 %v1514
        %1642 = vmatpush1.bf16.msra.mxu0 %v1513
        %1643 = vmatprep.subr.bf16.mxu0 %v1516
        %1644 = vmatpush1.bf16.msra.mxu0 %v1515
        %1645 = vmatprep.subr.bf16.mxu0 %v1518
        %1646 = vmatpush1.bf16.msra.mxu0 %v1517
        %1647 = vmatprep.subr.bf16.mxu0 %v1520
        %1648 = vmatpush1.bf16.msra.mxu0 %v1519
        %1649 = vmatprep.subr.bf16.mxu0 %v1522
        %1650 = vmatpush1.bf16.msra.mxu0 %v1521
        %1651 = vmatprep.subr.bf16.mxu0 %v1524
        %1652 = vmatpush1.bf16.msra.mxu0 %v1523
        %1653 = vmatprep.subr.bf16.mxu0 %v1526
        %1654 = vmatpush1.bf16.msra.mxu0 %v1525
        %1655 = vmatprep.subr.bf16.mxu0 %v1528
        %1656 = vmatpush1.bf16.msra.mxu0 %v1527
        %1657 = vmatprep.subr.bf16.mxu0 %v1530
        %1658 = vmatpush1.bf16.msra.mxu0 %v1529
        %1659 = vmatprep.subr.bf16.mxu0 %v1532
        %1660 = vmatpush1.bf16.msra.mxu0 %v1531
        %1661 = vmatprep.subr.bf16.mxu0 %v1534
        %1662 = vmatpush1.bf16.msra.mxu0 %v1533
        %1663 = vmatprep.subr.bf16.mxu0 %v1536
        %1664 = vmatpush1.bf16.msra.mxu0 %v1535
        %1665 = vmatprep.subr.bf16.mxu0 %v1538
        %1666 = vmatpush1.bf16.msra.mxu0 %v1537
        %1667 = vmatprep.mubr.bf16.mxu0 %v1236
        %1668 = vmatmul.mubr.bf16.gmra.mrb[0].mxu0 %v1235
        %v1669 = vpop.f32.mrb[0].mxu0
        %v1670 = vadd.f32 %v1308, %v1669
        %v1671 = vpop.f32.mrb[0].mxu0
        %v1672 = vadd.f32 %v1312, %v1671
        %v1673 = vpop.f32.mrb[0].mxu0
        %v1674 = vpop.f32.mrb[0].mxu0
        %1675 = vdwg.mxu0
        %1676 = vmatprep.subr.bf16.mxu0 %v1540
        %1677 = vmatpush1.bf16.msra.mxu0 %v1539
        %1678 = vmatprep.subr.bf16.mxu0 %v1542
        %1679 = vmatpush1.bf16.msra.mxu0 %v1541
        %1680 = vmatprep.subr.bf16.mxu0 %v1544
        %1681 = vmatpush1.bf16.msra.mxu0 %v1543
        %1682 = vmatprep.subr.bf16.mxu0 %v1546
        %1683 = vmatpush1.bf16.msra.mxu0 %v1545
        %1684 = vmatprep.subr.bf16.mxu0 %v1548
        %1685 = vmatpush1.bf16.msra.mxu0 %v1547
        %1686 = vmatprep.subr.bf16.mxu0 %v1550
        %1687 = vmatpush1.bf16.msra.mxu0 %v1549
        %1688 = vmatprep.subr.bf16.mxu0 %v1552
        %1689 = vmatpush1.bf16.msra.mxu0 %v1551
        %1690 = vmatprep.subr.bf16.mxu0 %v1554
        %1691 = vmatpush1.bf16.msra.mxu0 %v1553
        %1692 = vmatprep.subr.bf16.mxu0 %v1556
        %1693 = vmatpush1.bf16.msra.mxu0 %v1555
        %1694 = vmatprep.subr.bf16.mxu0 %v1558
        %1695 = vmatpush1.bf16.msra.mxu0 %v1557
        %1696 = vmatprep.subr.bf16.mxu0 %v1560
        %1697 = vmatpush1.bf16.msra.mxu0 %v1559
        %1698 = vmatprep.subr.bf16.mxu0 %v1562
        %1699 = vmatpush1.bf16.msra.mxu0 %v1561
        %1700 = vmatprep.subr.bf16.mxu0 %v1564
        %1701 = vmatpush1.bf16.msra.mxu0 %v1563
        %1702 = vmatprep.subr.bf16.mxu0 %v1566
        %1703 = vmatpush1.bf16.msra.mxu0 %v1565
        %1704 = vmatprep.subr.bf16.mxu0 %v1568
        %1705 = vmatpush1.bf16.msra.mxu0 %v1567
        %1706 = vmatprep.subr.bf16.mxu0 %v1570
        %1707 = vmatpush1.bf16.msra.mxu0 %v1569
        %1708 = vmatprep.mubr.bf16.mxu0 %v1238
        %1709 = vmatmul.mubr.bf16.gmra.mrb[0].mxu0 %v1237
        %v1710 = vpop.f32.mrb[0].mxu0
        %v1711 = vadd.f32 %v1670, %v1710
        %v1712 = vpop.f32.mrb[0].mxu0
        %v1713 = vadd.f32 %v1672, %v1712
        %v1714 = vpop.f32.mrb[0].mxu0
        %v1715 = vpop.f32.mrb[0].mxu0
        %1716 = vdwg.mxu0
        %v1717 = vld [vmem:[%s11] sm:$0x3]
        %v1718 = vld [vmem:[%s12] sm:$0x3]
        %v1719 = vadd.f32 %v1711, %v1713
        %1720 = vadd.xlane.f32.xlu0 %v1719
        %v1721 = vpop.xlane.xlu0 %1720
        %v1722 = vmul.f32 %v1721, %v612
        %v1723 = vmul.f32 %v1711, %v1711
        %v1724 = vmul.f32 %v1713, %v1713
        %v1725 = vadd.f32 %v1723, %v1724
        %1726 = vadd.xlane.f32.xlu0 %v1725
        %v1727 = vpop.xlane.xlu0 %1726
        %v1728 = vmul.f32 %v1727, %v612
        %v1729 = vmul.f32 %v1722, %v1722
        %v1730 = vsub.f32 %v1728, %v1729
        %v1731 = vadd.f32 %v1730, 1e-05
        %v1732 = vrsqrt.pop %v1731
        %v1733 = vsub.f32 0.0, %v1722
        %v1734 = vmul.f32 %v1733, %v1732
        %v1735 = vmul.f32 %v1711, %v1732
        %v1736 = vmul.f32 %v1713, %v1732
        %v1737 = vadd.f32 %v1735, %v1734
        %v1738 = vadd.f32 %v1736, %v1734
        %v1740 = vlaneseq
        %v1741 = vshrl.u32 %v1740, 7
        %v1742 = vsub.s32 0, %v1741
        %v1743 = vrot.slane %v1717, %v1742
        %v1744 = vlaneseq
        %v1745 = vshrl.u32 %v1744, 7
        %v1746 = vsub.s32 1, %v1745
        %v1747 = vrot.slane %v1717, %v1746
        %v1750 = vmul.f32 %v1737, %v1743
        %v1751 = vmul.f32 %v1738, %v1747
        %v1753 = vlaneseq
        %v1754 = vshrl.u32 %v1753, 7
        %v1755 = vsub.s32 0, %v1754
        %v1756 = vrot.slane %v1718, %v1755
        %v1757 = vlaneseq
        %v1758 = vshrl.u32 %v1757, 7
        %v1759 = vsub.s32 1, %v1758
        %v1760 = vrot.slane %v1718, %v1759
        %v1763 = vadd.f32 %v1750, %v1756
        %v1764 = vadd.f32 %v1751, %v1760
        %v1765 = vmax.f32 %v1763, 0.0
        %v1766 = vmax.f32 %v1764, 0.0
        %v1767 = vpack.c.bf16 %v1765, %v1765
        %v1768 = vpack.c.bf16 %v1766, %v1766
        %v1769 = vld [vmem:[#allocation6] sm:$0xf]
        %v1770 = vld [vmem:[#allocation6 + $0x4] sm:$0xf]
        %v1771 = vld [vmem:[#allocation6 + $0x8] sm:$0xf]
        %v1772 = vld [vmem:[#allocation6 + $0xc] sm:$0xf]
        %v1773 = vld [vmem:[#allocation6 + $0x10] sm:$0xf]
        %v1774 = vld [vmem:[#allocation6 + $0x14] sm:$0xf]
        %v1775 = vld [vmem:[#allocation6 + $0x18] sm:$0xf]
        %v1776 = vld [vmem:[#allocation6 + $0x1c] sm:$0xf]
        %v1777 = vld [vmem:[#allocation6 + $0x20] sm:$0xf]
        %v1778 = vld [vmem:[#allocation6 + $0x24] sm:$0xf]
        %v1779 = vld [vmem:[#allocation6 + $0x28] sm:$0xf]
        %v1780 = vld [vmem:[#allocation6 + $0x2c] sm:$0xf]
        %v1781 = vld [vmem:[#allocation6 + $0x30] sm:$0xf]
        %v1782 = vld [vmem:[#allocation6 + $0x34] sm:$0xf]
        %v1783 = vld [vmem:[#allocation6 + $0x38] sm:$0xf]
        %v1784 = vld [vmem:[#allocation6 + $0x3c] sm:$0xf]
        %v1785 = vld [vmem:[#allocation6 + $0x40] sm:$0xf]
        %v1786 = vld [vmem:[#allocation6 + $0x44] sm:$0xf]
        %v1787 = vld [vmem:[#allocation6 + $0x48] sm:$0xf]
        %v1788 = vld [vmem:[#allocation6 + $0x4c] sm:$0xf]
        %v1789 = vld [vmem:[#allocation6 + $0x50] sm:$0xf]
        %v1790 = vld [vmem:[#allocation6 + $0x54] sm:$0xf]
        %v1791 = vld [vmem:[#allocation6 + $0x58] sm:$0xf]
        %v1792 = vld [vmem:[#allocation6 + $0x5c] sm:$0xf]
        %v1793 = vld [vmem:[#allocation6 + $0x60] sm:$0xf]
        %v1794 = vld [vmem:[#allocation6 + $0x64] sm:$0xf]
        %v1795 = vld [vmem:[#allocation6 + $0x68] sm:$0xf]
        %v1796 = vld [vmem:[#allocation6 + $0x6c] sm:$0xf]
        %v1797 = vld [vmem:[#allocation6 + $0x70] sm:$0xf]
        %v1798 = vld [vmem:[#allocation6 + $0x74] sm:$0xf]
        %v1799 = vld [vmem:[#allocation6 + $0x78] sm:$0xf]
        %v1800 = vld [vmem:[#allocation6 + $0x7c] sm:$0xf]
        %v1801 = vld [vmem:[%s14] sm:$0x1]
        %v1803 = vlaneseq
        %v1804 = vshrl.u32 %v1803, 7
        %v1805 = vsub.s32 0, %v1804
        %v1806 = vrot.slane %v1801, %v1805
        %v1840 = vunpack.c.l.b16 %v1769
        %v1841 = vunpack.c.l.b16 %v1770
        %v1842 = vunpack.c.l.b16 %v1771
        %v1843 = vunpack.c.l.b16 %v1772
        %v1844 = vunpack.c.l.b16 %v1773
        %v1845 = vunpack.c.l.b16 %v1774
        %v1846 = vunpack.c.l.b16 %v1775
        %v1847 = vunpack.c.l.b16 %v1776
        %v1848 = vunpack.c.l.b16 %v1777
        %v1849 = vunpack.c.l.b16 %v1778
        %v1850 = vunpack.c.l.b16 %v1779
        %v1851 = vunpack.c.l.b16 %v1780
        %v1852 = vunpack.c.l.b16 %v1781
        %v1853 = vunpack.c.l.b16 %v1782
        %v1854 = vunpack.c.l.b16 %v1783
        %v1855 = vunpack.c.l.b16 %v1784
        %v1856 = vunpack.c.l.b16 %v1785
        %v1857 = vunpack.c.l.b16 %v1786
        %v1858 = vunpack.c.l.b16 %v1787
        %v1859 = vunpack.c.l.b16 %v1788
        %v1860 = vunpack.c.l.b16 %v1789
        %v1861 = vunpack.c.l.b16 %v1790
        %v1862 = vunpack.c.l.b16 %v1791
        %v1863 = vunpack.c.l.b16 %v1792
        %v1864 = vunpack.c.l.b16 %v1793
        %v1865 = vunpack.c.l.b16 %v1794
        %v1866 = vunpack.c.l.b16 %v1795
        %v1867 = vunpack.c.l.b16 %v1796
        %v1868 = vunpack.c.l.b16 %v1797
        %v1869 = vunpack.c.l.b16 %v1798
        %v1870 = vunpack.c.l.b16 %v1799
        %v1871 = vunpack.c.l.b16 %v1800
        %v1872 = vpack.c.b16 %v1841, %v1840
        %v1873 = vpack.c.b16 %v1843, %v1842
        %v1874 = vpack.c.b16 %v1845, %v1844
        %v1875 = vpack.c.b16 %v1847, %v1846
        %v1876 = vpack.c.b16 %v1849, %v1848
        %v1877 = vpack.c.b16 %v1851, %v1850
        %v1878 = vpack.c.b16 %v1853, %v1852
        %v1879 = vpack.c.b16 %v1855, %v1854
        %v1880 = vpack.c.b16 %v1857, %v1856
        %v1881 = vpack.c.b16 %v1859, %v1858
        %v1882 = vpack.c.b16 %v1861, %v1860
        %v1883 = vpack.c.b16 %v1863, %v1862
        %v1884 = vpack.c.b16 %v1865, %v1864
        %v1885 = vpack.c.b16 %v1867, %v1866
        %v1886 = vpack.c.b16 %v1869, %v1868
        %v1887 = vpack.c.b16 %v1871, %v1870
        %1904 = vmatprep.subr.bf16.mxu0 0
        %1905 = vmatpush1.bf16.msra.mxu0 %v1872
        %1906 = vmatprep.subr.bf16.mxu0 0
        %1907 = vmatpush1.bf16.msra.mxu0 %v1873
        %1908 = vmatprep.subr.bf16.mxu0 0
        %1909 = vmatpush1.bf16.msra.mxu0 %v1874
        %1910 = vmatprep.subr.bf16.mxu0 0
        %1911 = vmatpush1.bf16.msra.mxu0 %v1875
        %1912 = vmatprep.subr.bf16.mxu0 0
        %1913 = vmatpush1.bf16.msra.mxu0 %v1876
        %1914 = vmatprep.subr.bf16.mxu0 0
        %1915 = vmatpush1.bf16.msra.mxu0 %v1877
        %1916 = vmatprep.subr.bf16.mxu0 0
        %1917 = vmatpush1.bf16.msra.mxu0 %v1878
        %1918 = vmatprep.subr.bf16.mxu0 0
        %1919 = vmatpush1.bf16.msra.mxu0 %v1879
        %1920 = vmatprep.subr.bf16.mxu0 0
        %1921 = vmatpush1.bf16.msra.mxu0 %v1880
        %1922 = vmatprep.subr.bf16.mxu0 0
        %1923 = vmatpush1.bf16.msra.mxu0 %v1881
        %1924 = vmatprep.subr.bf16.mxu0 0
        %1925 = vmatpush1.bf16.msra.mxu0 %v1882
        %1926 = vmatprep.subr.bf16.mxu0 0
        %1927 = vmatpush1.bf16.msra.mxu0 %v1883
        %1928 = vmatprep.subr.bf16.mxu0 0
        %1929 = vmatpush1.bf16.msra.mxu0 %v1884
        %1930 = vmatprep.subr.bf16.mxu0 0
        %1931 = vmatpush1.bf16.msra.mxu0 %v1885
        %1932 = vmatprep.subr.bf16.mxu0 0
        %1933 = vmatpush1.bf16.msra.mxu0 %v1886
        %1934 = vmatprep.subr.bf16.mxu0 0
        %1935 = vmatpush1.bf16.msra.mxu0 %v1887
        %1936 = vmatprep.mubr.bf16.mxu0 %v1768
        %1937 = vmatmul.mubr.bf16.gmra.mrb[0].mxu0 %v1767
        %v1938 = vpop.f32.mrb[0].mxu0
        %v1939 = vadd.f32 %v1806, %v1938
        %v1940 = vpop.f32.mrb[0].mxu0
        %v1941 = vpop.f32.mrb[0].mxu0
        %v1942 = vpop.f32.mrb[0].mxu0
        %1943 = vdwg.mxu0
        %1944 = vst [vmem:[%s533] sm:$0xff] %v1939
        %p1945 = scmp.lt.s32.totalorder %s28, 1
        %s1946 = scalar_select %p1945, %s28, 1
        %s1947 = smul.addr %s1946, 8
        %s1948 = scalar_lea.vmem %s15, %s1947
        // Predicated region
        $region93: #{dqn_forward.1} parent=79 // pred_check
          %p1949 = pneg %p366
        $region94: #{dqn_forward.1} parent=79 // pred_check_branch
          %1951 = sbr.rel (%p1949) target = $region96
        $region95: #{dqn_forward.1} parent=79 // pred_region
          _
        $region96: #{dqn_forward.1} parent=79 // pred_fallthru
          _
      $region80: #{dqn_forward.1} parent=5 // pred_fallthru
        _
      %p1952 = scmp.le.s32.totalorder 2, %s23
      // Predicated region
      $region97: #{dqn_forward.1} parent=5 // pred_check
        %p1953 = pneg %p1952
      $region98: #{dqn_forward.1} parent=5 // pred_check_branch
        %1955 = sbr.rel (%p1953) target = $region100
      $region99: #{dqn_forward.1} parent=5 // pred_region
        %s1956 = ssub.s32 %s23, 2
        // Predicated region
        $region101: #{dqn_forward.1} parent=99 // pred_check
          %p1957 = pneg %p372
        $region102: #{dqn_forward.1} parent=99 // pred_check_branch
          %1959 = sbr.rel (%p1957) target = $region104
        $region103: #{dqn_forward.1} parent=99 // pred_region
          %p1960 = scmp.lt.s32.totalorder %s29, 1
          %s1961 = scalar_select %p1960, %s29, 1
          %s1962 = smul.addr %s1961, 8
          %s1963 = scalar_lea.vmem %s15, %s1962
        $region104: #{dqn_forward.1} parent=99 // pred_fallthru
          _
      $region100: #{dqn_forward.1} parent=5 // pred_fallthru
        _
    $region6: #{dqn_forward.1} parent=1 // loop_footer
      %s27 = sadd.s32 1, %s23
    $region7: #{dqn_forward.1} parent=1 // loop_footer_branch
      %22 = sbr.rel target = $region3
    $region8: #{dqn_forward.1} parent=1 // loop_exit
      _
    %1964 = vsyncpa [#allocation3], 1
    %s1965 = scalar_lea.sflag [#allocation3], 1
    %1966 = vsyncpa %s1965, 1
    %1967 = vsyncpa [#allocation5], 1

</llo_original>
